<compile_context>
chip_gen: v7x
topology: tpu7x:2x2x1
jax: 0.10.0
libtpu: 0.0.40
codegen_flags: <defaults>
</compile_context>

<pallas_src>
import functools

import jax
import jax.numpy as jnp
from jax.experimental import pallas as pl
from jax.experimental.pallas import tpu as pltpu


# ----------------------------- Pallas kernel --------------------------------

def _fused_resnet_kernel(x_ref, w1_ref, b1_ref, w2_ref, b2_ref, wo_ref, bo_ref,
                         traj_ref, proj_ref, act_ref):
    # x:(Bp,D)  w1:(1,D,Hp) b1:(1,1,Hp)  w2:(1,Hp,D) b2:(1,1,D)
    # wo:(D,Op) bo:(1,Op)   traj:(1,Bp,D) proj:(1,Bp,Op)  act scratch:(Bp,D)
    @pl.when(pl.program_id(0) == 0)
    def _():
        act_ref[...] = x_ref[...]

    x = act_ref[...]
    h = jnp.dot(x, w1_ref[0], preferred_element_type=jnp.float32) + b1_ref[0]
    h = jnp.maximum(h, 0.0)                                   # ReLU (VPU)
    y = jnp.dot(h, w2_ref[0], preferred_element_type=jnp.float32) + b2_ref[0]
    y = jnp.maximum(y, 0.0)                                   # ReLU (VPU)
    out = x + y                                               # residual add

    act_ref[...] = out                                        # carry to next layer
    traj_ref[0] = out
    # per-layer projection (lane-dense Op=128); pred == last layer's row.
    proj_ref[0] = (
        jnp.dot(out, wo_ref[...], preferred_element_type=jnp.float32) + bo_ref[...]
    )


# ----------------------------- wrapper ---------------------------------------

@jax.jit
def _fused_resnet(x_pad, w1s, b1s, w2s, b2s, wo_pad, bo_pad):
    L, D, Hp = w1s.shape
    Bp = x_pad.shape[0]
    Op = wo_pad.shape[1]
    return pl.pallas_call(
        _fused_resnet_kernel,
        out_shape=(
            jax.ShapeDtypeStruct((L, Bp, D), jnp.float32),    # traj (all layers)
            jax.ShapeDtypeStruct((L, Bp, Op), jnp.float32),   # projected traj
        ),
        grid_spec=pltpu.PrefetchScalarGridSpec(
            num_scalar_prefetch=0,
            grid=(L,),
            in_specs=[
                pl.BlockSpec((Bp, D), lambda l: (0, 0)),        # x (loaded once)
                pl.BlockSpec((1, D, Hp), lambda l: (l, 0, 0)),  # W1[l]
                pl.BlockSpec((1, 1, Hp), lambda l: (l, 0, 0)),  # b1[l]
                pl.BlockSpec((1, Hp, D), lambda l: (l, 0, 0)),  # W2[l]
                pl.BlockSpec((1, 1, D), lambda l: (l, 0, 0)),   # b2[l]
                pl.BlockSpec((D, Op), lambda l: (0, 0)),        # Wo (loaded once)
                pl.BlockSpec((1, Op), lambda l: (0, 0)),        # bo
            ],
            out_specs=(
                pl.BlockSpec((1, Bp, D), lambda l: (l, 0, 0)),
                pl.BlockSpec((1, Bp, Op), lambda l: (l, 0, 0)),
            ),
            scratch_shapes=[pltpu.VMEM((Bp, D), jnp.float32)],  # running activation
        ),
        compiler_params=pltpu.CompilerParams(
            dimension_semantics=("arbitrary",),   # layers are sequentially dependent
        ),
    )(x_pad, w1s, b1s, w2s, b2s, wo_pad, bo_pad)


# ----------------------------- params ----------------------------------------

def init_params(key, data_dim, hidden_dim, num_layers, output_dim):
    """PyTorch-style Linear init: U(-1/sqrt(fan_in), 1/sqrt(fan_in))."""
    params = {"blocks": []}

    def lin(key, fan_in, fan_out):
        k1, k2 = jax.random.split(key)
        bound = 1.0 / jnp.sqrt(fan_in)
        w = jax.random.uniform(k1, (fan_in, fan_out), jnp.float32, -bound, bound)
        b = jax.random.uniform(k2, (1, fan_out), jnp.float32, -bound, bound)
        return w, b

    for _ in range(num_layers):
        key, k1, k2 = jax.random.split(key, 3)
        w1, b1 = lin(k1, data_dim, hidden_dim)
        w2, b2 = lin(k2, hidden_dim, data_dim)
        params["blocks"].append((w1, b1, w2, b2))

    key, kout = jax.random.split(key)
    params["out"] = lin(kout, data_dim, output_dim)
    return params


def _round_up(n, m):
    return ((n + m - 1) // m) * m


def prepare_params(params):
    """Stack per-layer weights and zero-pad hidden / output dims to 128 lanes.

    Zero-padding the hidden dim is bit-exact: extra h columns are
    relu(x @ 0 + 0) = 0 and the matching zero rows of W2 contribute nothing.
    """
    blocks = params["blocks"]
    D, H = blocks[0][0].shape
    Hp = _round_up(max(H, 128), 128)

    w1s = jnp.stack([jnp.pad(w1, ((0, 0), (0, Hp - H))) for (w1, _, _, _) in blocks])
    b1s = jnp.stack([jnp.pad(b1, ((0, 0), (0, Hp - H))) for (_, b1, _, _) in blocks])
    w2s = jnp.stack([jnp.pad(w2, ((0, Hp - H), (0, 0))) for (_, _, w2, _) in blocks])
    b2s = jnp.stack([b2 for (_, _, _, b2) in blocks])

    wo, bo = params["out"]
    O = wo.shape[1]
    Op = _round_up(max(O, 128), 128)
    wo_pad = jnp.pad(wo, ((0, 0), (0, Op - O)))
    bo_pad = jnp.pad(bo, ((0, 0), (0, Op - O)))

    return {
        "w1s": w1s, "b1s": b1s, "w2s": w2s, "b2s": b2s,
        "wo": wo_pad, "bo": bo_pad,
        "out_dim": O, "num_layers": len(blocks),
    }


# ----------------------------- model forward ---------------------------------

def resnet_forward(fused, x, is_img=True, return_features=False):
    """Mirrors ResNet.forward. x is NCHW (or already (B, D) if not an image)."""
    B = x.shape[0]
    x_flat = x.reshape(B, -1).astype(jnp.float32)

    Bp = _round_up(max(B, 8), 8)                       # f32 sublane multiple
    x_pad = jnp.pad(x_flat, ((0, Bp - B), (0, 0)))

    traj_all, proj_all = _fused_resnet(
        x_pad, fused["w1s"], fused["b1s"], fused["w2s"], fused["b2s"],
        fused["wo"], fused["bo"])

    L = fused["num_layers"]
    O = fused["out_dim"]

    # features == residual_blocks(x.view(B,-1)) == last traj entry (exact).
    features = traj_all[L - 1, :B, :]
    pred = proj_all[L - 1, :B, :O]

    if return_features:
        return features, pred

    if is_img:
        traj = [traj_all[k, :B, :] for k in range(L)]
        _traj = [proj_all[k, :B, :O] for k in range(L)]
    else:
        # non-image path: torch code only records the first block in traj.
        traj = [traj_all[0, :B, :]]
        _traj = [proj_all[0, :B, :O]]

    return pred, _traj, traj


# ----------------------------- reference (plain JAX) --------------------------

def _ref_block(x, w1, b1, w2, b2):
    h = jnp.maximum(x @ w1 + b1, 0.0)
    y = jnp.maximum(h @ w2 + b2, 0.0)
    return x + y


def resnet_reference(params, x):
    B = x.shape[0]
    h = x.reshape(B, -1)
    traj = []
    for (w1, b1, w2, b2) in params["blocks"]:
        h = _ref_block(h, w1, b1, w2, b2)
        traj.append(h)
    wo, bo = params["out"]
    pred = traj[-1] @ wo + bo
    _traj = [t @ wo + bo for t in traj]
    return pred, _traj, traj


# ----------------------------- main -------------------------------------------

if __name__ == "__main__":
    # small, module-consistent shapes: image input (B, C, H, W) = (2, 4, 16, 16)
    B, C, H, W = 2, 4, 16, 16
    data_dim = C * H * W          # 1024 (flattened per-sample)
    hidden_dim = 32
    num_layers = 3
    output_dim = 1

    key = jax.random.PRNGKey(0)
    key, kx, kp = jax.random.split(key, 3)
    x = jax.random.normal(kx, (B, C, H, W), dtype=jnp.float32)
    params = init_params(kp, data_dim, hidden_dim, num_layers, output_dim)
    fused = prepare_params(params)

    pred, _traj, traj = resnet_forward(fused, x)
    jax.block_until_ready(pred)
    jax.block_until_ready(_traj)
    jax.block_until_ready(traj)

    # sanity check against pure-JAX reference
    pred_r, _traj_r, traj_r = resnet_reference(params, x)
    assert jnp.allclose(pred, pred_r, atol=1e-4, rtol=1e-4)
    for a, b in zip(traj, traj_r):
        assert jnp.allclose(a, b, atol=1e-4, rtol=1e-4)
    for a, b in zip(_traj, _traj_r):
        assert jnp.allclose(a, b, atol=1e-4, rtol=1e-4)

    assert pred.shape == (B, output_dim)
    assert len(traj) == num_layers and len(_traj) == num_layers

    # return_features path
    feats, pred2 = resnet_forward(fused, x, return_features=True)
    jax.block_until_ready(feats)
    assert jnp.allclose(pred2, pred_r, atol=1e-4, rtol=1e-4)
    assert jnp.allclose(feats, traj_r[-1], atol=1e-4, rtol=1e-4)

    print("KERNEL_OK")
</pallas_src>

<mosaic_0001>
module attributes {stable_mosaic.version = 11 : i64} {
  func.func @_fused_resnet_kernel(%arg0: i32, %arg1: memref<8x1024xf32, #tpu.memory_space<vmem>>, %arg2: memref<1x1024x128xf32, #tpu.memory_space<vmem>>, %arg3: memref<1x1x128xf32, #tpu.memory_space<vmem>>, %arg4: memref<1x128x1024xf32, #tpu.memory_space<vmem>>, %arg5: memref<1x1x1024xf32, #tpu.memory_space<vmem>>, %arg6: memref<1024x128xf32, #tpu.memory_space<vmem>>, %arg7: memref<1x128xf32, #tpu.memory_space<vmem>>, %arg8: memref<1x8x1024xf32, #tpu.memory_space<vmem>>, %arg9: memref<1x8x128xf32, #tpu.memory_space<vmem>>, %arg10: memref<8x1024xf32, #tpu.memory_space<vmem>>) attributes {dimension_semantics = [#tpu.dimension_semantics<arbitrary>], iteration_bounds = array<i64: 3>, scalar_prefetch = 0 : i64, scratch_operands = 1 : i64, tpu.core_type = #tpu.core_type<tc>, window_params = [{pipeline_mode = #tpu.pipeline_mode<synchronous>, transform_indices = @transform_0, window_bounds = array<i64: 8, 1024>}, {transform_indices = @transform_1, window_bounds = array<i64: 1, 1024, 128>}, {transform_indices = @transform_2, window_bounds = array<i64: 1, 1, 128>}, {transform_indices = @transform_3, window_bounds = array<i64: 1, 128, 1024>}, {transform_indices = @transform_4, window_bounds = array<i64: 1, 1, 1024>}, {pipeline_mode = #tpu.pipeline_mode<synchronous>, transform_indices = @transform_5, window_bounds = array<i64: 1024, 128>}, {pipeline_mode = #tpu.pipeline_mode<synchronous>, transform_indices = @transform_6, window_bounds = array<i64: 1, 128>}, {transform_indices = @transform_7, window_bounds = array<i64: 1, 8, 1024>}, {transform_indices = @transform_8, window_bounds = array<i64: 1, 8, 128>}]} {
    %c0_i32 = arith.constant 0 : i32
    %0 = arith.cmpi eq, %arg0, %c0_i32 : i32
    %1 = arith.extui %0 : i1 to i32
    %c0_i32_0 = arith.constant 0 : i32
    %2 = arith.cmpi ne, %1, %c0_i32_0 : i32
    scf.if %2 {
      %c0_30 = arith.constant 0 : index
      %c0_31 = arith.constant 0 : index
      %35 = vector.load %arg1[%c0_30, %c0_31] : memref<8x1024xf32, #tpu.memory_space<vmem>>, vector<8x1024xf32>
      %c0_32 = arith.constant 0 : index
      %c0_33 = arith.constant 0 : index
      %36 = vector.load %arg10[%c0_32, %c0_33] : memref<8x1024xf32, #tpu.memory_space<vmem>>, vector<8x1024xf32>
      tpu.vector_store %arg10[%c0_32, %c0_33], %35 {strides = array<i32>} : memref<8x1024xf32, #tpu.memory_space<vmem>>, vector<8x1024xf32>,
    } else {
    }
    %c0 = arith.constant 0 : index
    %c0_1 = arith.constant 0 : index
    %3 = vector.load %arg10[%c0, %c0_1] : memref<8x1024xf32, #tpu.memory_space<vmem>>, vector<8x1024xf32>
    %c0_2 = arith.constant 0 : index
    %c0_3 = arith.constant 0 : index
    %c0_4 = arith.constant 0 : index
    %4 = vector.load %arg2[%c0_2, %c0_3, %c0_4] : memref<1x1024x128xf32, #tpu.memory_space<vmem>>, vector<1x1024x128xf32>
    %5 = vector.shape_cast %4 : vector<1x1024x128xf32> to vector<1024x128xf32>
    %cst = arith.constant dense<0.000000e+00> : vector<8x128xf32>
    %6 = tpu.matmul %3, %5, %cst {dimension_numbers = #tpu.dot_dimension_numbers<[1], [0], [0], [1], [0, 0, 1, 1], [], []>} : vector<8x1024xf32>, vector<1024x128xf32>, vector<8x128xf32> -> vector<8x128xf32>
    %c0_5 = arith.constant 0 : index
    %c0_6 = arith.constant 0 : index
    %c0_7 = arith.constant 0 : index
    %7 = vector.load %arg3[%c0_5, %c0_6, %c0_7] : memref<1x1x128xf32, #tpu.memory_space<vmem>>, vector<1x1x128xf32>
    %8 = vector.shape_cast %7 : vector<1x1x128xf32> to vector<1x128xf32>
    %9 = vector.broadcast %8 : vector<1x128xf32> to vector<8x128xf32>
    %10 = arith.addf %6, %9 : vector<8x128xf32>
    %cst_8 = arith.constant 0.000000e+00 : f32
    %11 = vector.broadcast %cst_8 : f32 to vector<8x128xf32>
    %12 = arith.maximumf %10, %11 : vector<8x128xf32>
    %c0_9 = arith.constant 0 : index
    %c0_10 = arith.constant 0 : index
    %c0_11 = arith.constant 0 : index
    %13 = vector.load %arg4[%c0_9, %c0_10, %c0_11] : memref<1x128x1024xf32, #tpu.memory_space<vmem>>, vector<1x128x1024xf32>
    %14 = vector.shape_cast %13 : vector<1x128x1024xf32> to vector<128x1024xf32>
    %cst_12 = arith.constant dense<0.000000e+00> : vector<8x1024xf32>
    %15 = tpu.matmul %12, %14, %cst_12 {dimension_numbers = #tpu.dot_dimension_numbers<[1], [0], [0], [1], [0, 0, 1, 1], [], []>} : vector<8x128xf32>, vector<128x1024xf32>, vector<8x1024xf32> -> vector<8x1024xf32>
    %c0_13 = arith.constant 0 : index
    %c0_14 = arith.constant 0 : index
    %c0_15 = arith.constant 0 : index
    %16 = vector.load %arg5[%c0_13, %c0_14, %c0_15] : memref<1x1x1024xf32, #tpu.memory_space<vmem>>, vector<1x1x1024xf32>
    %17 = vector.shape_cast %16 : vector<1x1x1024xf32> to vector<1x1024xf32>
    %18 = vector.broadcast %17 : vector<1x1024xf32> to vector<8x1024xf32>
    %19 = arith.addf %15, %18 : vector<8x1024xf32>
    %cst_16 = arith.constant 0.000000e+00 : f32
    %20 = vector.broadcast %cst_16 : f32 to vector<8x1024xf32>
    %21 = arith.maximumf %19, %20 : vector<8x1024xf32>
    %22 = arith.addf %3, %21 : vector<8x1024xf32>
    %c0_17 = arith.constant 0 : index
    %c0_18 = arith.constant 0 : index
    %23 = vector.load %arg10[%c0_17, %c0_18] : memref<8x1024xf32, #tpu.memory_space<vmem>>, vector<8x1024xf32>
    tpu.vector_store %arg10[%c0_17, %c0_18], %22 {strides = array<i32>} : memref<8x1024xf32, #tpu.memory_space<vmem>>, vector<8x1024xf32>,
    %c0_19 = arith.constant 0 : index
    %c0_20 = arith.constant 0 : index
    %c0_21 = arith.constant 0 : index
    %24 = vector.load %arg8[%c0_19, %c0_20, %c0_21] : memref<1x8x1024xf32, #tpu.memory_space<vmem>>, vector<1x8x1024xf32>
    %25 = vector.shape_cast %24 : vector<1x8x1024xf32> to vector<8x1024xf32>
    %26 = vector.shape_cast %22 : vector<8x1024xf32> to vector<1x8x1024xf32>
    tpu.vector_store %arg8[%c0_19, %c0_20, %c0_21], %26 {strides = array<i32>} : memref<1x8x1024xf32, #tpu.memory_space<vmem>>, vector<1x8x1024xf32>,
    %c0_22 = arith.constant 0 : index
    %c0_23 = arith.constant 0 : index
    %27 = vector.load %arg6[%c0_22, %c0_23] : memref<1024x128xf32, #tpu.memory_space<vmem>>, vector<1024x128xf32>
    %cst_24 = arith.constant dense<0.000000e+00> : vector<8x128xf32>
    %28 = tpu.matmul %22, %27, %cst_24 {dimension_numbers = #tpu.dot_dimension_numbers<[1], [0], [0], [1], [0, 0, 1, 1], [], []>} : vector<8x1024xf32>, vector<1024x128xf32>, vector<8x128xf32> -> vector<8x128xf32>
    %c0_25 = arith.constant 0 : index
    %c0_26 = arith.constant 0 : index
    %29 = vector.load %arg7[%c0_25, %c0_26] : memref<1x128xf32, #tpu.memory_space<vmem>>, vector<1x128xf32>
    %30 = vector.broadcast %29 : vector<1x128xf32> to vector<8x128xf32>
    %31 = arith.addf %28, %30 : vector<8x128xf32>
    %c0_27 = arith.constant 0 : index
    %c0_28 = arith.constant 0 : index
    %c0_29 = arith.constant 0 : index
    %32 = vector.load %arg9[%c0_27, %c0_28, %c0_29] : memref<1x8x128xf32, #tpu.memory_space<vmem>>, vector<1x8x128xf32>
    %33 = vector.shape_cast %32 : vector<1x8x128xf32> to vector<8x128xf32>
    %34 = vector.shape_cast %31 : vector<8x128xf32> to vector<1x8x128xf32>
    tpu.vector_store %arg9[%c0_27, %c0_28, %c0_29], %34 {strides = array<i32>} : memref<1x8x128xf32, #tpu.memory_space<vmem>>, vector<1x8x128xf32>,
    return
  }
  func.func @transform_0(%arg0: i32) -> (i32, i32) {
    %c0_i32 = arith.constant 0 : i32
    %c0_i32_0 = arith.constant 0 : i32
    %c0_i32_1 = arith.constant 0 : i32
    return %c0_i32, %c0_i32_0 : i32, i32
  }
  func.func @transform_1(%arg0: i32) -> (i32, i32, i32) {
    %c0_i32 = arith.constant 0 : i32
    %c0_i32_0 = arith.constant 0 : i32
    %c0_i32_1 = arith.constant 0 : i32
    return %arg0, %c0_i32, %c0_i32_0 : i32, i32, i32
  }
  func.func @transform_2(%arg0: i32) -> (i32, i32, i32) {
    %c0_i32 = arith.constant 0 : i32
    %c0_i32_0 = arith.constant 0 : i32
    %c0_i32_1 = arith.constant 0 : i32
    return %arg0, %c0_i32, %c0_i32_0 : i32, i32, i32
  }
  func.func @transform_3(%arg0: i32) -> (i32, i32, i32) {
    %c0_i32 = arith.constant 0 : i32
    %c0_i32_0 = arith.constant 0 : i32
    %c0_i32_1 = arith.constant 0 : i32
    return %arg0, %c0_i32, %c0_i32_0 : i32, i32, i32
  }
  func.func @transform_4(%arg0: i32) -> (i32, i32, i32) {
    %c0_i32 = arith.constant 0 : i32
    %c0_i32_0 = arith.constant 0 : i32
    %c0_i32_1 = arith.constant 0 : i32
    return %arg0, %c0_i32, %c0_i32_0 : i32, i32, i32
  }
  func.func @transform_5(%arg0: i32) -> (i32, i32) {
    %c0_i32 = arith.constant 0 : i32
    %c0_i32_0 = arith.constant 0 : i32
    %c0_i32_1 = arith.constant 0 : i32
    return %c0_i32, %c0_i32_0 : i32, i32
  }
  func.func @transform_6(%arg0: i32) -> (i32, i32) {
    %c0_i32 = arith.constant 0 : i32
    %c0_i32_0 = arith.constant 0 : i32
    %c0_i32_1 = arith.constant 0 : i32
    return %c0_i32, %c0_i32_0 : i32, i32
  }
  func.func @transform_7(%arg0: i32) -> (i32, i32, i32) {
    %c0_i32 = arith.constant 0 : i32
    %c0_i32_0 = arith.constant 0 : i32
    %c0_i32_1 = arith.constant 0 : i32
    return %arg0, %c0_i32, %c0_i32_0 : i32, i32, i32
  }
  func.func @transform_8(%arg0: i32) -> (i32, i32, i32) {
    %c0_i32 = arith.constant 0 : i32
    %c0_i32_0 = arith.constant 0 : i32
    %c0_i32_1 = arith.constant 0 : i32
    return %arg0, %c0_i32, %c0_i32_0 : i32, i32, i32
  }
}

</mosaic_0001>

<llo_original>
// kernel: _fused_resnet.1
$region0: #{_fused_resnet.1}
  #allocation0 [shape = 'u32[]', space=smem, size = 0x4, offset = 0x4, fixed_abs, tag = 'smem constant byte address 0x4 - core index']
  #allocation1 [shape = 'u32[144,128]{1,0:T(1,128)}', space=vmem, size = 0x12000, scoped, tag = 'internal scratch']
  #allocation2 [shape = 'f32[8,1024]{1,0:T(8,128)}', space=vmem, size = 0x8000, scoped, tag = 'scratch operand']
  %s0 = inlined_call_operand.hbm [shape: f32[8,1024], index: 0, kind: input, shape index: {}]
  %s1 = inlined_call_operand.hbm [shape: f32[3,1024,128], index: 1, kind: input, shape index: {}]
  %s2 = inlined_call_operand.hbm [shape: f32[3,1,128], index: 2, kind: input, shape index: {}]
  %s3 = inlined_call_operand.hbm [shape: f32[3,128,1024], index: 3, kind: input, shape index: {}]
  %s4 = inlined_call_operand.hbm [shape: f32[3,1,1024], index: 4, kind: input, shape index: {}]
  %s5 = inlined_call_operand.hbm [shape: f32[1024,128], index: 5, kind: input, shape index: {}]
  %s6 = inlined_call_operand.hbm [shape: f32[1,128], index: 6, kind: input, shape index: {}]
  %s7 = inlined_call_operand.hbm [shape: f32[3,8,1024], index: 7, kind: output, shape index: {0}]
  %s8 = inlined_call_operand.hbm [shape: f32[3,8,128], index: 8, kind: output, shape index: {1}]
  %9 = xla_tuple %s7, %s8
  %s10 = sld [smem:[#allocation0]]
  $region101: #{_fused_resnet.1} parent=0
    _
  %s12 = ssub.s32 1, %s10
  %s13 = scalar_select 0, %s12, %s10
  $region1: #{_fused_resnet.1} parent=0
    #allocation3 [shape = 'u8[32768]{0}', space=vmem, size = 0x8000, scoped, tag = 'input window, operand 0, single buffered']
    #allocation4 [shape = 's32[2]{0}', space=sflag, size = 0x8, scoped, tag = 'scoped memory for _fused_resnet.1']
    #allocation5 [shape = 's32[2]{0}', space=sflag, size = 0x8, scoped, tag = 'scoped memory for _fused_resnet.1']
    #allocation6 [shape = 'u8[1048576]{0}', space=vmem, size = 0x100000, scoped, tag = 'input window, operand 1']
    #allocation7 [shape = 's32[2]{0}', space=sflag, size = 0x8, scoped, tag = 'scoped memory for _fused_resnet.1']
    #allocation8 [shape = 'u8[1024]{0}', space=vmem, size = 0x400, scoped, tag = 'input window, operand 2']
    #allocation9 [shape = 'u8[1048576]{0}', space=vmem, size = 0x100000, scoped, tag = 'input window, operand 3']
    #allocation10 [shape = 's32[2]{0}', space=sflag, size = 0x8, scoped, tag = 'scoped memory for _fused_resnet.1']
    #allocation11 [shape = 'u8[8192]{0}', space=vmem, size = 0x2000, scoped, tag = 'input window, operand 4']
    #allocation12 [shape = 'u8[524288]{0}', space=vmem, size = 0x80000, scoped, tag = 'input window, operand 5, single buffered']
    #allocation13 [shape = 's32[1]{0}', space=sflag, size = 0x4, scoped, tag = 'scoped memory for _fused_resnet.1']
    #allocation14 [shape = 'u8[512]{0}', space=vmem, size = 0x400, scoped, tag = 'input window, operand 6, single buffered']
    #allocation15 [shape = 'u8[65536]{0}', space=vmem, size = 0x10000, scoped, tag = 'output window, operand 0']
    #allocation16 [shape = 'u8[8192]{0}', space=vmem, size = 0x2000, scoped, tag = 'output window, operand 1']
    #allocation17 [shape = 's32[2]{0}', space=sflag, size = 0x8, scoped, tag = 'scoped memory for _fused_resnet.1']
    %14 = vsyncpa [#allocation4], 0
    %15 = vsyncpa [#allocation7], 0
    %s16 = scalar_lea.sflag [#allocation7], 1
    %17 = vsyncpa %s16, 0
    %18 = vsyncpa [#allocation10], 0
    %s19 = scalar_lea.sflag [#allocation10], 1
    %20 = vsyncpa %s19, 0
    %21 = vsyncpa [#allocation13], 0
    %22 = vsyncpa [#allocation5], 0
    %s23 = scalar_lea.sflag [#allocation5], 1
    %24 = vsyncpa %s23, 0
    %25 = vsyncpa [#allocation17], 0
    %s26 = scalar_lea.sflag [#allocation17], 1
    %27 = vsyncpa %s26, 0
    loop: start=0, step=1, limit=5
    $region2: #{_fused_resnet.1} parent=1 // loop_pre_header
      _
    $region3: #{_fused_resnet.1} parent=1 // loop_header
      %s29 = sphi 0, %s33
      %p30 = scmp.ge.s32.totalorder %s29, 5
      %s37 = sphi 0, %s37
      %s39 = sphi 0, %s37
      %s40 = sphi 0, %s39
      %s54 = sphi 0, %s40
      %s60 = sphi 0, %s62
      %s63 = sphi 0, %s60
      %s64 = sphi 0, %s63
      %s80 = sphi 0, %s64
      %s86 = sphi 0, %s88
      %s89 = sphi 0, %s86
      %s90 = sphi 0, %s89
      %s106 = sphi 0, %s90
      %s112 = sphi 0, %s114
      %s115 = sphi 0, %s112
      %s116 = sphi 0, %s115
      %s132 = sphi 0, %s116
      %s138 = sphi 0, %s140
      %s141 = sphi 0, %s138
      %s142 = sphi 0, %s141
      %s158 = sphi 0, %s142
      %s162 = sphi 0, %s162
      %s164 = sphi 0, %s162
      %s165 = sphi 0, %s164
      %s179 = sphi 0, %s165
      %s183 = sphi 0, %s183
      %s185 = sphi 0, %s183
      %s186 = sphi 0, %s185
      %s200 = sphi 0, %s186
      %s206 = sphi 0, %s208
      %s209 = sphi 0, %s206
      %s210 = sphi 0, %s209
      %s226 = sphi 0, %s210
      %s232 = sphi 0, %s234
      %s235 = sphi 0, %s232
      %s236 = sphi 0, %s235
      %s252 = sphi 0, %s236
    $region4: #{_fused_resnet.1} parent=1 // loop_header_branch
      %32 = sbr.rel (%p30) target = $region8
    $region5: #{_fused_resnet.1} parent=1 // loop_body
      %s34 = ssub.s32 %s29, 1
      %s35 = ssub.s32 %s29, 2
      %s36 = sadd.s32 %s29, 1
      %s38 = sadd.s32 %s37, 1
      %p41 = scmp.eq.s32.totalorder %s29, 2
      %p42 = scmp.ne.s32.totalorder %s37, %s39
      %p43 = scmp.eq.s32.totalorder %s29, 0
      %p44 = por %p42, %p43
      %p45 = scmp.ne.s32.totalorder %s37, %s39
      %p46 = scmp.eq.s32.totalorder %s34, 2
      %p47 = por %p45, %p46
      %p48 = scmp.ne.s32.totalorder %s39, %s40
      %p49 = scmp.eq.s32.totalorder %s34, 0
      %p50 = por %p48, %p49
      %p51 = scmp.ne.s32.totalorder %s39, %s40
      %p52 = scmp.eq.s32.totalorder %s35, 2
      %p53 = por %p51, %p52
      %p55 = scmp.ne.s32.totalorder %s40, %s54
      %p56 = scmp.eq.s32.totalorder %s35, 0
      %p57 = por %p55, %p56
      %s58 = ssub.s32 %s29, %s36
      %p59 = scmp.eq.s32.totalorder %s58, 0
      %s61 = sadd.s32 %s60, 1
      %s62 = scalar_select %p59, %s60, %s61
      %p65 = pneg %p59
      %p66 = scmp.eq.s32.totalorder %s29, 2
      %p67 = por %p65, %p66
      %p68 = scmp.ne.s32.totalorder %s60, %s63
      %p69 = scmp.eq.s32.totalorder %s29, 0
      %p70 = por %p68, %p69
      %p71 = scmp.ne.s32.totalorder %s60, %s63
      %p72 = scmp.eq.s32.totalorder %s34, 2
      %p73 = por %p71, %p72
      %p74 = scmp.ne.s32.totalorder %s63, %s64
      %p75 = scmp.eq.s32.totalorder %s34, 0
      %p76 = por %p74, %p75
      %p77 = scmp.ne.s32.totalorder %s63, %s64
      %p78 = scmp.eq.s32.totalorder %s35, 2
      %p79 = por %p77, %p78
      %p81 = scmp.ne.s32.totalorder %s64, %s80
      %p82 = scmp.eq.s32.totalorder %s35, 0
      %p83 = por %p81, %p82
      %s84 = ssub.s32 %s29, %s36
      %p85 = scmp.eq.s32.totalorder %s84, 0
      %s87 = sadd.s32 %s86, 1
      %s88 = scalar_select %p85, %s86, %s87
      %p91 = pneg %p85
      %p92 = scmp.eq.s32.totalorder %s29, 2
      %p93 = por %p91, %p92
      %p94 = scmp.ne.s32.totalorder %s86, %s89
      %p95 = scmp.eq.s32.totalorder %s29, 0
      %p96 = por %p94, %p95
      %p97 = scmp.ne.s32.totalorder %s86, %s89
      %p98 = scmp.eq.s32.totalorder %s34, 2
      %p99 = por %p97, %p98
      %p100 = scmp.ne.s32.totalorder %s89, %s90
      %p101 = scmp.eq.s32.totalorder %s34, 0
      %p102 = por %p100, %p101
      %p103 = scmp.ne.s32.totalorder %s89, %s90
      %p104 = scmp.eq.s32.totalorder %s35, 2
      %p105 = por %p103, %p104
      %p107 = scmp.ne.s32.totalorder %s90, %s106
      %p108 = scmp.eq.s32.totalorder %s35, 0
      %p109 = por %p107, %p108
      %s110 = ssub.s32 %s29, %s36
      %p111 = scmp.eq.s32.totalorder %s110, 0
      %s113 = sadd.s32 %s112, 1
      %s114 = scalar_select %p111, %s112, %s113
      %p117 = pneg %p111
      %p118 = scmp.eq.s32.totalorder %s29, 2
      %p119 = por %p117, %p118
      %p120 = scmp.ne.s32.totalorder %s112, %s115
      %p121 = scmp.eq.s32.totalorder %s29, 0
      %p122 = por %p120, %p121
      %p123 = scmp.ne.s32.totalorder %s112, %s115
      %p124 = scmp.eq.s32.totalorder %s34, 2
      %p125 = por %p123, %p124
      %p126 = scmp.ne.s32.totalorder %s115, %s116
      %p127 = scmp.eq.s32.totalorder %s34, 0
      %p128 = por %p126, %p127
      %p129 = scmp.ne.s32.totalorder %s115, %s116
      %p130 = scmp.eq.s32.totalorder %s35, 2
      %p131 = por %p129, %p130
      %p133 = scmp.ne.s32.totalorder %s116, %s132
      %p134 = scmp.eq.s32.totalorder %s35, 0
      %p135 = por %p133, %p134
      %s136 = ssub.s32 %s29, %s36
      %p137 = scmp.eq.s32.totalorder %s136, 0
      %s139 = sadd.s32 %s138, 1
      %s140 = scalar_select %p137, %s138, %s139
      %p143 = pneg %p137
      %p144 = scmp.eq.s32.totalorder %s29, 2
      %p145 = por %p143, %p144
      %p146 = scmp.ne.s32.totalorder %s138, %s141
      %p147 = scmp.eq.s32.totalorder %s29, 0
      %p148 = por %p146, %p147
      %p149 = scmp.ne.s32.totalorder %s138, %s141
      %p150 = scmp.eq.s32.totalorder %s34, 2
      %p151 = por %p149, %p150
      %p152 = scmp.ne.s32.totalorder %s141, %s142
      %p153 = scmp.eq.s32.totalorder %s34, 0
      %p154 = por %p152, %p153
      %p155 = scmp.ne.s32.totalorder %s141, %s142
      %p156 = scmp.eq.s32.totalorder %s35, 2
      %p157 = por %p155, %p156
      %p159 = scmp.ne.s32.totalorder %s142, %s158
      %p160 = scmp.eq.s32.totalorder %s35, 0
      %p161 = por %p159, %p160
      %s163 = sadd.s32 %s162, 1
      %p166 = scmp.eq.s32.totalorder %s29, 2
      %p167 = scmp.ne.s32.totalorder %s162, %s164
      %p168 = scmp.eq.s32.totalorder %s29, 0
      %p169 = por %p167, %p168
      %p170 = scmp.ne.s32.totalorder %s162, %s164
      %p171 = scmp.eq.s32.totalorder %s34, 2
      %p172 = por %p170, %p171
      %p173 = scmp.ne.s32.totalorder %s164, %s165
      %p174 = scmp.eq.s32.totalorder %s34, 0
      %p175 = por %p173, %p174
      %p176 = scmp.ne.s32.totalorder %s164, %s165
      %p177 = scmp.eq.s32.totalorder %s35, 2
      %p178 = por %p176, %p177
      %p180 = scmp.ne.s32.totalorder %s165, %s179
      %p181 = scmp.eq.s32.totalorder %s35, 0
      %p182 = por %p180, %p181
      %s184 = sadd.s32 %s183, 1
      %p187 = scmp.eq.s32.totalorder %s29, 2
      %p188 = scmp.ne.s32.totalorder %s183, %s185
      %p189 = scmp.eq.s32.totalorder %s29, 0
      %p190 = por %p188, %p189
      %p191 = scmp.ne.s32.totalorder %s183, %s185
      %p192 = scmp.eq.s32.totalorder %s34, 2
      %p193 = por %p191, %p192
      %p194 = scmp.ne.s32.totalorder %s185, %s186
      %p195 = scmp.eq.s32.totalorder %s34, 0
      %p196 = por %p194, %p195
      %p197 = scmp.ne.s32.totalorder %s185, %s186
      %p198 = scmp.eq.s32.totalorder %s35, 2
      %p199 = por %p197, %p198
      %p201 = scmp.ne.s32.totalorder %s186, %s200
      %p202 = scmp.eq.s32.totalorder %s35, 0
      %p203 = por %p201, %p202
      %s204 = ssub.s32 %s29, %s36
      %p205 = scmp.eq.s32.totalorder %s204, 0
      %s207 = sadd.s32 %s206, 1
      %s208 = scalar_select %p205, %s206, %s207
      %p211 = pneg %p205
      %p212 = scmp.eq.s32.totalorder %s29, 2
      %p213 = por %p211, %p212
      %p214 = scmp.ne.s32.totalorder %s206, %s209
      %p215 = scmp.eq.s32.totalorder %s29, 0
      %p216 = por %p214, %p215
      %p217 = scmp.ne.s32.totalorder %s206, %s209
      %p218 = scmp.eq.s32.totalorder %s34, 2
      %p219 = por %p217, %p218
      %p220 = scmp.ne.s32.totalorder %s209, %s210
      %p221 = scmp.eq.s32.totalorder %s34, 0
      %p222 = por %p220, %p221
      %p223 = scmp.ne.s32.totalorder %s209, %s210
      %p224 = scmp.eq.s32.totalorder %s35, 2
      %p225 = por %p223, %p224
      %p227 = scmp.ne.s32.totalorder %s210, %s226
      %p228 = scmp.eq.s32.totalorder %s35, 0
      %p229 = por %p227, %p228
      %s230 = ssub.s32 %s29, %s36
      %p231 = scmp.eq.s32.totalorder %s230, 0
      %s233 = sadd.s32 %s232, 1
      %s234 = scalar_select %p231, %s232, %s233
      %p237 = pneg %p231
      %p238 = scmp.eq.s32.totalorder %s29, 2
      %p239 = por %p237, %p238
      %p240 = scmp.ne.s32.totalorder %s232, %s235
      %p241 = scmp.eq.s32.totalorder %s29, 0
      %p242 = por %p240, %p241
      %p243 = scmp.ne.s32.totalorder %s232, %s235
      %p244 = scmp.eq.s32.totalorder %s34, 2
      %p245 = por %p243, %p244
      %p246 = scmp.ne.s32.totalorder %s235, %s236
      %p247 = scmp.eq.s32.totalorder %s34, 0
      %p248 = por %p246, %p247
      %p249 = scmp.ne.s32.totalorder %s235, %s236
      %p250 = scmp.eq.s32.totalorder %s35, 2
      %p251 = por %p249, %p250
      %p253 = scmp.ne.s32.totalorder %s236, %s252
      %p254 = scmp.eq.s32.totalorder %s35, 0
      %p255 = por %p253, %p254
      %p256 = scmp.le.s32.totalorder 1, %s29
      %p257 = scmp.lt.s32.totalorder %s29, 4
      %p258 = pnand %p256, %p257
      %p259 = pneg %p258
      // Predicated region
      $region9: #{_fused_resnet.1} parent=5 // pred_check
        _
      $region10: #{_fused_resnet.1} parent=5 // pred_check_branch
        %261 = sbr.rel (%p258) target = $region12
      $region11: #{_fused_resnet.1} parent=5 // pred_region
        %s262 = ssub.s32 %s29, 1
        // Predicated region
        $region13: #{_fused_resnet.1} parent=11 // pred_check
          %p263 = pneg %p50
        $region14: #{_fused_resnet.1} parent=11 // pred_check_branch
          %265 = sbr.rel (%p263) target = $region16
        $region15: #{_fused_resnet.1} parent=11 // pred_region
          %s267 = ssub.s32 1024, 1024
          %268 = vsyncadd [#allocation4], %s267
          %s270 = sshll.u32 [#allocation3], 4
          %s271 = int_to_ptr.vmem [resolvable:$true] %s270
          %273 = dma.hbm_to_vmem [thread:$0]  %s0, 1024, %s271, [#allocation4]
        $region16: #{_fused_resnet.1} parent=11 // pred_fallthru
          _
        // Predicated region
        $region17: #{_fused_resnet.1} parent=11 // pred_check
          %p274 = pneg %p175
        $region18: #{_fused_resnet.1} parent=11 // pred_check_branch
          %276 = sbr.rel (%p274) target = $region20
        $region19: #{_fused_resnet.1} parent=11 // pred_region
          %s278 = ssub.s32 16384, 16384
          %279 = vsyncadd [#allocation13], %s278
          %s280 = sshll.u32 [#allocation12], 4
          %s281 = int_to_ptr.vmem [resolvable:$true] %s280
          %286 = dma.hbm_to_vmem [thread:$0]  %s5, 16384, %s281, [#allocation13], 128, 128, 8
        $region20: #{_fused_resnet.1} parent=11 // pred_fallthru
          _
        // Predicated region
        $region21: #{_fused_resnet.1} parent=11 // pred_check
          %p287 = pneg %p196
        $region22: #{_fused_resnet.1} parent=11 // pred_check_branch
          %289 = sbr.rel (%p287) target = $region24
        $region23: #{_fused_resnet.1} parent=11 // pred_region
          %s291 = ssub.s32 16, 16
          %292 = vsyncadd [#allocation13], %s291
          %s294 = sshll.u32 [#allocation14], 4
          %s295 = int_to_ptr.vmem [resolvable:$true] %s294
          %297 = dma.hbm_to_vmem [thread:$0]  %s6, 16, %s295, [#allocation13]
        $region24: #{_fused_resnet.1} parent=11 // pred_fallthru
          _
      $region12: #{_fused_resnet.1} parent=5 // pred_fallthru
        _
      %p298 = scmp.lt.s32.totalorder %s29, 3
      // Predicated region
      $region25: #{_fused_resnet.1} parent=5 // pred_check
        %p299 = pneg %p298
      $region26: #{_fused_resnet.1} parent=5 // pred_check_branch
        %301 = sbr.rel (%p299) target = $region28
      $region27: #{_fused_resnet.1} parent=5 // pred_region
        // Predicated region
        $region29: #{_fused_resnet.1} parent=27 // pred_check
          %p302 = pneg %p70
        $region30: #{_fused_resnet.1} parent=27 // pred_check_branch
          %304 = sbr.rel (%p302) target = $region32
        $region31: #{_fused_resnet.1} parent=27 // pred_region
          %s305 = sand.u32 %s29, 1
          %s306 = scalar_lea.sflag [#allocation7], %s305
          %s307 = sand.u32 %s60, 1
          %s308 = smul.addr %s307, 1024
          %s309 = scalar_lea.vmem [#allocation6], %s308
          %s311 = ssub.s32 16384, 16384
          %312 = vsyncadd %s306, %s311
          %s313 = smul.addr %s29, 128
          %s314 = smul.addr %s313, 128
          %s315 = scalar_lea.hbm %s1, %s314
          %s316 = sshll.u32 %s309, 4
          %s317 = int_to_ptr.vmem [resolvable:$true] %s316
          %322 = dma.hbm_to_vmem [thread:$0]  %s315, 16384, %s317, %s306, 128, 128, 8
        $region32: #{_fused_resnet.1} parent=27 // pred_fallthru
          _
        // Predicated region
        $region33: #{_fused_resnet.1} parent=27 // pred_check
          %p323 = pneg %p96
        $region34: #{_fused_resnet.1} parent=27 // pred_check_branch
          %325 = sbr.rel (%p323) target = $region36
        $region35: #{_fused_resnet.1} parent=27 // pred_region
          %s326 = sand.u32 %s29, 1
          %s327 = scalar_lea.sflag [#allocation7], %s326
          %s328 = sand.u32 %s86, 1
          %s329 = scalar_lea.vmem [#allocation8], %s328
          %s331 = ssub.s32 16, 16
          %332 = vsyncadd %s327, %s331
          %s333 = smul.addr %s29, 16
          %s334 = scalar_lea.hbm %s2, %s333
          %s336 = sshll.u32 %s329, 4
          %s337 = int_to_ptr.vmem [resolvable:$true] %s336
          %339 = dma.hbm_to_vmem [thread:$0]  %s334, 16, %s337, %s327
        $region36: #{_fused_resnet.1} parent=27 // pred_fallthru
          _
        // Predicated region
        $region37: #{_fused_resnet.1} parent=27 // pred_check
          %p340 = pneg %p122
        $region38: #{_fused_resnet.1} parent=27 // pred_check_branch
          %342 = sbr.rel (%p340) target = $region40
        $region39: #{_fused_resnet.1} parent=27 // pred_region
          %s343 = sand.u32 %s29, 1
          %s344 = scalar_lea.sflag [#allocation10], %s343
          %s345 = sand.u32 %s112, 1
          %s346 = smul.addr %s345, 1024
          %s347 = scalar_lea.vmem [#allocation9], %s346
          %s349 = ssub.s32 16384, 16384
          %350 = vsyncadd %s344, %s349
          %s351 = smul.addr %s29, 128
          %s352 = smul.addr %s351, 128
          %s353 = scalar_lea.hbm %s3, %s352
          %s354 = sshll.u32 %s347, 4
          %s355 = int_to_ptr.vmem [resolvable:$true] %s354
          %360 = dma.hbm_to_vmem [thread:$0]  %s353, 16384, %s355, %s344, 1024, 1024, 64
        $region40: #{_fused_resnet.1} parent=27 // pred_fallthru
          _
        // Predicated region
        $region41: #{_fused_resnet.1} parent=27 // pred_check
          %p361 = pneg %p148
        $region42: #{_fused_resnet.1} parent=27 // pred_check_branch
          %363 = sbr.rel (%p361) target = $region44
        $region43: #{_fused_resnet.1} parent=27 // pred_region
          %s364 = sand.u32 %s29, 1
          %s365 = scalar_lea.sflag [#allocation10], %s364
          %s366 = sand.u32 %s138, 1
          %s367 = smul.addr %s366, 8
          %s368 = scalar_lea.vmem [#allocation11], %s367
          %s370 = ssub.s32 128, 128
          %371 = vsyncadd %s365, %s370
          %s372 = smul.addr %s29, 8
          %s373 = smul.addr %s372, 16
          %s374 = scalar_lea.hbm %s4, %s373
          %s376 = sshll.u32 %s368, 4
          %s377 = int_to_ptr.vmem [resolvable:$true] %s376
          %379 = dma.hbm_to_vmem [thread:$0]  %s374, 128, %s377, %s365
        $region44: #{_fused_resnet.1} parent=27 // pred_fallthru
          _
      $region28: #{_fused_resnet.1} parent=5 // pred_fallthru
        _
      %p380 = scmp.le.s32.totalorder 1, %s29
      %p381 = scmp.lt.s32.totalorder %s29, 4
      %p382 = pnand %p380, %p381
      %p383 = pneg %p382
      // Predicated region
      $region45: #{_fused_resnet.1} parent=5 // pred_check
        _
      $region46: #{_fused_resnet.1} parent=5 // pred_check_branch
        %385 = sbr.rel (%p382) target = $region48
      $region47: #{_fused_resnet.1} parent=5 // pred_region
        %s386 = ssub.s32 %s29, 1
        // Predicated region
        $region49: #{_fused_resnet.1} parent=47 // pred_check
          %p387 = pneg %p50
        $region50: #{_fused_resnet.1} parent=47 // pred_check_branch
          %389 = sbr.rel (%p387) target = $region52
        $region51: #{_fused_resnet.1} parent=47 // pred_region
          %390 = dma.done [#allocation4], 1024
        $region52: #{_fused_resnet.1} parent=47 // pred_fallthru
          _
        %s391 = sand.u32 %s34, 1
        %s392 = scalar_lea.sflag [#allocation7], %s391
        %s393 = sand.u32 %s63, 1
        %s394 = smul.addr %s393, 1024
        %s395 = scalar_lea.vmem [#allocation6], %s394
        // Predicated region
        $region53: #{_fused_resnet.1} parent=47 // pred_check
          %p396 = pneg %p76
        $region54: #{_fused_resnet.1} parent=47 // pred_check_branch
          %398 = sbr.rel (%p396) target = $region56
        $region55: #{_fused_resnet.1} parent=47 // pred_region
          %399 = dma.done %s392, 16384
        $region56: #{_fused_resnet.1} parent=47 // pred_fallthru
          _
        %s400 = sand.u32 %s34, 1
        %s401 = scalar_lea.sflag [#allocation7], %s400
        %s402 = sand.u32 %s89, 1
        %s403 = scalar_lea.vmem [#allocation8], %s402
        // Predicated region
        $region57: #{_fused_resnet.1} parent=47 // pred_check
          %p404 = pneg %p102
        $region58: #{_fused_resnet.1} parent=47 // pred_check_branch
          %406 = sbr.rel (%p404) target = $region60
        $region59: #{_fused_resnet.1} parent=47 // pred_region
          %407 = dma.done %s401, 16
        $region60: #{_fused_resnet.1} parent=47 // pred_fallthru
          _
        %s408 = sand.u32 %s34, 1
        %s409 = scalar_lea.sflag [#allocation10], %s408
        %s410 = sand.u32 %s115, 1
        %s411 = smul.addr %s410, 1024
        %s412 = scalar_lea.vmem [#allocation9], %s411
        // Predicated region
        $region61: #{_fused_resnet.1} parent=47 // pred_check
          %p413 = pneg %p128
        $region62: #{_fused_resnet.1} parent=47 // pred_check_branch
          %415 = sbr.rel (%p413) target = $region64
        $region63: #{_fused_resnet.1} parent=47 // pred_region
          %416 = dma.done %s409, 16384
        $region64: #{_fused_resnet.1} parent=47 // pred_fallthru
          _
        %s417 = sand.u32 %s34, 1
        %s418 = scalar_lea.sflag [#allocation10], %s417
        %s419 = sand.u32 %s141, 1
        %s420 = smul.addr %s419, 8
        %s421 = scalar_lea.vmem [#allocation11], %s420
        // Predicated region
        $region65: #{_fused_resnet.1} parent=47 // pred_check
          %p422 = pneg %p154
        $region66: #{_fused_resnet.1} parent=47 // pred_check_branch
          %424 = sbr.rel (%p422) target = $region68
        $region67: #{_fused_resnet.1} parent=47 // pred_region
          %425 = dma.done %s418, 128
        $region68: #{_fused_resnet.1} parent=47 // pred_fallthru
          _
        // Predicated region
        $region69: #{_fused_resnet.1} parent=47 // pred_check
          %p426 = pneg %p175
        $region70: #{_fused_resnet.1} parent=47 // pred_check_branch
          %428 = sbr.rel (%p426) target = $region72
        $region71: #{_fused_resnet.1} parent=47 // pred_region
          %429 = dma.done [#allocation13], 16384
        $region72: #{_fused_resnet.1} parent=47 // pred_fallthru
          _
        // Predicated region
        $region73: #{_fused_resnet.1} parent=47 // pred_check
          %p430 = pneg %p196
        $region74: #{_fused_resnet.1} parent=47 // pred_check_branch
          %432 = sbr.rel (%p430) target = $region76
        $region75: #{_fused_resnet.1} parent=47 // pred_region
          %433 = dma.done [#allocation13], 16
        $region76: #{_fused_resnet.1} parent=47 // pred_fallthru
          _
        %p434 = pneg %p50
        %p435 = pneg %p47
        %s436 = sand.u32 %s34, 1
        %s437 = scalar_lea.sflag [#allocation7], %s436
        %s438 = sand.u32 %s63, 1
        %s439 = smul.addr %s438, 1024
        %s440 = scalar_lea.vmem [#allocation6], %s439
        %p441 = pneg %p76
        %p442 = pneg %p73
        %s443 = sand.u32 %s34, 1
        %s444 = scalar_lea.sflag [#allocation7], %s443
        %s445 = sand.u32 %s89, 1
        %s446 = scalar_lea.vmem [#allocation8], %s445
        %p447 = pneg %p102
        %p448 = pneg %p99
        %s449 = sand.u32 %s34, 1
        %s450 = scalar_lea.sflag [#allocation10], %s449
        %s451 = sand.u32 %s115, 1
        %s452 = smul.addr %s451, 1024
        %s453 = scalar_lea.vmem [#allocation9], %s452
        %p454 = pneg %p128
        %p455 = pneg %p125
        %s456 = sand.u32 %s34, 1
        %s457 = scalar_lea.sflag [#allocation10], %s456
        %s458 = sand.u32 %s141, 1
        %s459 = smul.addr %s458, 8
        %s460 = scalar_lea.vmem [#allocation11], %s459
        %p461 = pneg %p154
        %p462 = pneg %p151
        %p463 = pneg %p175
        %p464 = pneg %p172
        %p465 = pneg %p196
        %p466 = pneg %p193
        %p467 = pneg %p222
        %p468 = pneg %p219
        %s469 = sand.u32 %s209, 1
        %s470 = scalar_lea.sflag [#allocation5], %s469
        %s471 = sand.u32 %s209, 1
        %s472 = smul.addr %s471, 64
        %s473 = scalar_lea.vmem [#allocation15], %s472
        %p474 = pneg %p248
        %p475 = pneg %p245
        %s476 = sand.u32 %s235, 1
        %s477 = scalar_lea.sflag [#allocation17], %s476
        %s478 = sand.u32 %s235, 1
        %s479 = smul.addr %s478, 8
        %s480 = scalar_lea.vmem [#allocation16], %s479
        %p481 = scmp.eq.s32.totalorder %s34, 0
        // Predicated region
        $region77: #{_fused_resnet.1} parent=47 // pred_check
          %p482 = pneg %p481
        $region78: #{_fused_resnet.1} parent=47 // pred_check_branch
          %484 = sbr.rel (%p482) target = $region80
        $region79: #{_fused_resnet.1} parent=47 // pred_region
          %v485 = vld [vmem:[#allocation3] sm:$0xff]
          %v486 = vld [vmem:[#allocation3 + $0x8] sm:$0xff]
          %v487 = vld [vmem:[#allocation3 + $0x10] sm:$0xff]
          %v488 = vld [vmem:[#allocation3 + $0x18] sm:$0xff]
          %v489 = vld [vmem:[#allocation3 + $0x20] sm:$0xff]
          %v490 = vld [vmem:[#allocation3 + $0x28] sm:$0xff]
          %v491 = vld [vmem:[#allocation3 + $0x30] sm:$0xff]
          %v492 = vld [vmem:[#allocation3 + $0x38] sm:$0xff]
          %493 = vst [vmem:[#allocation2] sm:$0xff] %v485
          %494 = vst [vmem:[#allocation2 + $0x8] sm:$0xff] %v486
          %495 = vst [vmem:[#allocation2 + $0x10] sm:$0xff] %v487
          %496 = vst [vmem:[#allocation2 + $0x18] sm:$0xff] %v488
          %497 = vst [vmem:[#allocation2 + $0x20] sm:$0xff] %v489
          %498 = vst [vmem:[#allocation2 + $0x28] sm:$0xff] %v490
          %499 = vst [vmem:[#allocation2 + $0x30] sm:$0xff] %v491
          %500 = vst [vmem:[#allocation2 + $0x38] sm:$0xff] %v492
        $region80: #{_fused_resnet.1} parent=47 // pred_fallthru
          _
        %v501 = vld [vmem:[#allocation2] sm:$0xff]
        %v502 = vld [vmem:[#allocation2 + $0x8] sm:$0xff]
        %v503 = vld [vmem:[#allocation2 + $0x10] sm:$0xff]
        %v504 = vld [vmem:[#allocation2 + $0x18] sm:$0xff]
        %v505 = vld [vmem:[#allocation2 + $0x20] sm:$0xff]
        %v506 = vld [vmem:[#allocation2 + $0x28] sm:$0xff]
        %v507 = vld [vmem:[#allocation2 + $0x30] sm:$0xff]
        %v508 = vld [vmem:[#allocation2 + $0x38] sm:$0xff]
        %v509 = vld [vmem:[%s395] sm:$0xff]
        %v510 = vld [vmem:[%s395 + $0x8] sm:$0xff]
        %v511 = vld [vmem:[%s395 + $0x10] sm:$0xff]
        %v512 = vld [vmem:[%s395 + $0x18] sm:$0xff]
        %v513 = vld [vmem:[%s395 + $0x20] sm:$0xff]
        %v514 = vld [vmem:[%s395 + $0x28] sm:$0xff]
        %v515 = vld [vmem:[%s395 + $0x30] sm:$0xff]
        %v516 = vld [vmem:[%s395 + $0x38] sm:$0xff]
        %v517 = vld [vmem:[%s395 + $0x40] sm:$0xff]
        %v518 = vld [vmem:[%s395 + $0x48] sm:$0xff]
        %v519 = vld [vmem:[%s395 + $0x50] sm:$0xff]
        %v520 = vld [vmem:[%s395 + $0x58] sm:$0xff]
        %v521 = vld [vmem:[%s395 + $0x60] sm:$0xff]
        %v522 = vld [vmem:[%s395 + $0x68] sm:$0xff]
        %v523 = vld [vmem:[%s395 + $0x70] sm:$0xff]
        %v524 = vld [vmem:[%s395 + $0x78] sm:$0xff]
        %v525 = vld [vmem:[%s395 + $0x80] sm:$0xff]
        %v526 = vld [vmem:[%s395 + $0x88] sm:$0xff]
        %v527 = vld [vmem:[%s395 + $0x90] sm:$0xff]
        %v528 = vld [vmem:[%s395 + $0x98] sm:$0xff]
        %v529 = vld [vmem:[%s395 + $0xa0] sm:$0xff]
        %v530 = vld [vmem:[%s395 + $0xa8] sm:$0xff]
        %v531 = vld [vmem:[%s395 + $0xb0] sm:$0xff]
        %v532 = vld [vmem:[%s395 + $0xb8] sm:$0xff]
        %v533 = vld [vmem:[%s395 + $0xc0] sm:$0xff]
        %v534 = vld [vmem:[%s395 + $0xc8] sm:$0xff]
        %v535 = vld [vmem:[%s395 + $0xd0] sm:$0xff]
        %v536 = vld [vmem:[%s395 + $0xd8] sm:$0xff]
        %v537 = vld [vmem:[%s395 + $0xe0] sm:$0xff]
        %v538 = vld [vmem:[%s395 + $0xe8] sm:$0xff]
        %v539 = vld [vmem:[%s395 + $0xf0] sm:$0xff]
        %v540 = vld [vmem:[%s395 + $0xf8] sm:$0xff]
        %v541 = vld [vmem:[%s395 + $0x100] sm:$0xff]
        %v542 = vld [vmem:[%s395 + $0x108] sm:$0xff]
        %v543 = vld [vmem:[%s395 + $0x110] sm:$0xff]
        %v544 = vld [vmem:[%s395 + $0x118] sm:$0xff]
        %v545 = vld [vmem:[%s395 + $0x120] sm:$0xff]
        %v546 = vld [vmem:[%s395 + $0x128] sm:$0xff]
        %v547 = vld [vmem:[%s395 + $0x130] sm:$0xff]
        %v548 = vld [vmem:[%s395 + $0x138] sm:$0xff]
        %v549 = vld [vmem:[%s395 + $0x140] sm:$0xff]
        %v550 = vld [vmem:[%s395 + $0x148] sm:$0xff]
        %v551 = vld [vmem:[%s395 + $0x150] sm:$0xff]
        %v552 = vld [vmem:[%s395 + $0x158] sm:$0xff]
        %v553 = vld [vmem:[%s395 + $0x160] sm:$0xff]
        %v554 = vld [vmem:[%s395 + $0x168] sm:$0xff]
        %v555 = vld [vmem:[%s395 + $0x170] sm:$0xff]
        %v556 = vld [vmem:[%s395 + $0x178] sm:$0xff]
        %v557 = vld [vmem:[%s395 + $0x180] sm:$0xff]
        %v558 = vld [vmem:[%s395 + $0x188] sm:$0xff]
        %v559 = vld [vmem:[%s395 + $0x190] sm:$0xff]
        %v560 = vld [vmem:[%s395 + $0x198] sm:$0xff]
        %v561 = vld [vmem:[%s395 + $0x1a0] sm:$0xff]
        %v562 = vld [vmem:[%s395 + $0x1a8] sm:$0xff]
        %v563 = vld [vmem:[%s395 + $0x1b0] sm:$0xff]
        %v564 = vld [vmem:[%s395 + $0x1b8] sm:$0xff]
        %v565 = vld [vmem:[%s395 + $0x1c0] sm:$0xff]
        %v566 = vld [vmem:[%s395 + $0x1c8] sm:$0xff]
        %v567 = vld [vmem:[%s395 + $0x1d0] sm:$0xff]
        %v568 = vld [vmem:[%s395 + $0x1d8] sm:$0xff]
        %v569 = vld [vmem:[%s395 + $0x1e0] sm:$0xff]
        %v570 = vld [vmem:[%s395 + $0x1e8] sm:$0xff]
        %v571 = vld [vmem:[%s395 + $0x1f0] sm:$0xff]
        %v572 = vld [vmem:[%s395 + $0x1f8] sm:$0xff]
        %v573 = vld [vmem:[%s395 + $0x200] sm:$0xff]
        %v574 = vld [vmem:[%s395 + $0x208] sm:$0xff]
        %v575 = vld [vmem:[%s395 + $0x210] sm:$0xff]
        %v576 = vld [vmem:[%s395 + $0x218] sm:$0xff]
        %v577 = vld [vmem:[%s395 + $0x220] sm:$0xff]
        %v578 = vld [vmem:[%s395 + $0x228] sm:$0xff]
        %v579 = vld [vmem:[%s395 + $0x230] sm:$0xff]
        %v580 = vld [vmem:[%s395 + $0x238] sm:$0xff]
        %v581 = vld [vmem:[%s395 + $0x240] sm:$0xff]
        %v582 = vld [vmem:[%s395 + $0x248] sm:$0xff]
        %v583 = vld [vmem:[%s395 + $0x250] sm:$0xff]
        %v584 = vld [vmem:[%s395 + $0x258] sm:$0xff]
        %v585 = vld [vmem:[%s395 + $0x260] sm:$0xff]
        %v586 = vld [vmem:[%s395 + $0x268] sm:$0xff]
        %v587 = vld [vmem:[%s395 + $0x270] sm:$0xff]
        %v588 = vld [vmem:[%s395 + $0x278] sm:$0xff]
        %v589 = vld [vmem:[%s395 + $0x280] sm:$0xff]
        %v590 = vld [vmem:[%s395 + $0x288] sm:$0xff]
        %v591 = vld [vmem:[%s395 + $0x290] sm:$0xff]
        %v592 = vld [vmem:[%s395 + $0x298] sm:$0xff]
        %v593 = vld [vmem:[%s395 + $0x2a0] sm:$0xff]
        %v594 = vld [vmem:[%s395 + $0x2a8] sm:$0xff]
        %v595 = vld [vmem:[%s395 + $0x2b0] sm:$0xff]
        %v596 = vld [vmem:[%s395 + $0x2b8] sm:$0xff]
        %v597 = vld [vmem:[%s395 + $0x2c0] sm:$0xff]
        %v598 = vld [vmem:[%s395 + $0x2c8] sm:$0xff]
        %v599 = vld [vmem:[%s395 + $0x2d0] sm:$0xff]
        %v600 = vld [vmem:[%s395 + $0x2d8] sm:$0xff]
        %v601 = vld [vmem:[%s395 + $0x2e0] sm:$0xff]
        %v602 = vld [vmem:[%s395 + $0x2e8] sm:$0xff]
        %v603 = vld [vmem:[%s395 + $0x2f0] sm:$0xff]
        %v604 = vld [vmem:[%s395 + $0x2f8] sm:$0xff]
        %v605 = vld [vmem:[%s395 + $0x300] sm:$0xff]
        %v606 = vld [vmem:[%s395 + $0x308] sm:$0xff]
        %v607 = vld [vmem:[%s395 + $0x310] sm:$0xff]
        %v608 = vld [vmem:[%s395 + $0x318] sm:$0xff]
        %v609 = vld [vmem:[%s395 + $0x320] sm:$0xff]
        %v610 = vld [vmem:[%s395 + $0x328] sm:$0xff]
        %v611 = vld [vmem:[%s395 + $0x330] sm:$0xff]
        %v612 = vld [vmem:[%s395 + $0x338] sm:$0xff]
        %v613 = vld [vmem:[%s395 + $0x340] sm:$0xff]
        %v614 = vld [vmem:[%s395 + $0x348] sm:$0xff]
        %v615 = vld [vmem:[%s395 + $0x350] sm:$0xff]
        %v616 = vld [vmem:[%s395 + $0x358] sm:$0xff]
        %v617 = vld [vmem:[%s395 + $0x360] sm:$0xff]
        %v618 = vld [vmem:[%s395 + $0x368] sm:$0xff]
        %v619 = vld [vmem:[%s395 + $0x370] sm:$0xff]
        %v620 = vld [vmem:[%s395 + $0x378] sm:$0xff]
        %v621 = vld [vmem:[%s395 + $0x380] sm:$0xff]
        %v622 = vld [vmem:[%s395 + $0x388] sm:$0xff]
        %v623 = vld [vmem:[%s395 + $0x390] sm:$0xff]
        %v624 = vld [vmem:[%s395 + $0x398] sm:$0xff]
        %v625 = vld [vmem:[%s395 + $0x3a0] sm:$0xff]
        %v626 = vld [vmem:[%s395 + $0x3a8] sm:$0xff]
        %v627 = vld [vmem:[%s395 + $0x3b0] sm:$0xff]
        %v628 = vld [vmem:[%s395 + $0x3b8] sm:$0xff]
        %v629 = vld [vmem:[%s395 + $0x3c0] sm:$0xff]
        %v630 = vld [vmem:[%s395 + $0x3c8] sm:$0xff]
        %v631 = vld [vmem:[%s395 + $0x3d0] sm:$0xff]
        %v632 = vld [vmem:[%s395 + $0x3d8] sm:$0xff]
        %v633 = vld [vmem:[%s395 + $0x3e0] sm:$0xff]
        %v634 = vld [vmem:[%s395 + $0x3e8] sm:$0xff]
        %v635 = vld [vmem:[%s395 + $0x3f0] sm:$0xff]
        %v636 = vld [vmem:[%s395 + $0x3f8] sm:$0xff]
        %v637 = vld [vmem:[%s403] sm:$0x1]
        %v639 = vlaneseq
        %v640 = vshrl.u32 %v639, 7
        %v641 = vsub.s32 0, %v640
        %v642 = vrot.slane %v637, %v641
        %644 = vmatprep.subr.mxu0 0.0
        %645 = vmatpush1.msra.mxu0 %v509
        %646 = vmatprep.subr.mxu0 0.0
        %647 = vmatpush1.msra.mxu0 %v510
        %648 = vmatprep.subr.mxu0 0.0
        %649 = vmatpush1.msra.mxu0 %v511
        %650 = vmatprep.subr.mxu0 0.0
        %651 = vmatpush1.msra.mxu0 %v512
        %652 = vmatprep.subr.mxu0 0.0
        %653 = vmatpush1.msra.mxu0 %v513
        %654 = vmatprep.subr.mxu0 0.0
        %655 = vmatpush1.msra.mxu0 %v514
        %656 = vmatprep.subr.mxu0 0.0
        %657 = vmatpush1.msra.mxu0 %v515
        %658 = vmatprep.subr.mxu0 0.0
        %659 = vmatpush1.msra.mxu0 %v516
        %660 = vmatprep.subr.mxu0 0.0
        %661 = vmatpush1.msra.mxu0 %v517
        %662 = vmatprep.subr.mxu0 0.0
        %663 = vmatpush1.msra.mxu0 %v518
        %664 = vmatprep.subr.mxu0 0.0
        %665 = vmatpush1.msra.mxu0 %v519
        %666 = vmatprep.subr.mxu0 0.0
        %667 = vmatpush1.msra.mxu0 %v520
        %668 = vmatprep.subr.mxu0 0.0
        %669 = vmatpush1.msra.mxu0 %v521
        %670 = vmatprep.subr.mxu0 0.0
        %671 = vmatpush1.msra.mxu0 %v522
        %672 = vmatprep.subr.mxu0 0.0
        %673 = vmatpush1.msra.mxu0 %v523
        %674 = vmatprep.subr.mxu0 0.0
        %675 = vmatpush1.msra.mxu0 %v524
        %676 = vmatprep.subr.mxu0 0.0
        %677 = vmatpush1.msra.mxu0 %v525
        %678 = vmatprep.subr.mxu0 0.0
        %679 = vmatpush1.msra.mxu0 %v526
        %680 = vmatprep.subr.mxu0 0.0
        %681 = vmatpush1.msra.mxu0 %v527
        %682 = vmatprep.subr.mxu0 0.0
        %683 = vmatpush1.msra.mxu0 %v528
        %684 = vmatprep.subr.mxu0 0.0
        %685 = vmatpush1.msra.mxu0 %v529
        %686 = vmatprep.subr.mxu0 0.0
        %687 = vmatpush1.msra.mxu0 %v530
        %688 = vmatprep.subr.mxu0 0.0
        %689 = vmatpush1.msra.mxu0 %v531
        %690 = vmatprep.subr.mxu0 0.0
        %691 = vmatpush1.msra.mxu0 %v532
        %692 = vmatprep.subr.mxu0 0.0
        %693 = vmatpush1.msra.mxu0 %v533
        %694 = vmatprep.subr.mxu0 0.0
        %695 = vmatpush1.msra.mxu0 %v534
        %696 = vmatprep.subr.mxu0 0.0
        %697 = vmatpush1.msra.mxu0 %v535
        %698 = vmatprep.subr.mxu0 0.0
        %699 = vmatpush1.msra.mxu0 %v536
        %700 = vmatprep.subr.mxu0 0.0
        %701 = vmatpush1.msra.mxu0 %v537
        %702 = vmatprep.subr.mxu0 0.0
        %703 = vmatpush1.msra.mxu0 %v538
        %704 = vmatprep.subr.mxu0 0.0
        %705 = vmatpush1.msra.mxu0 %v539
        %706 = vmatprep.subr.mxu0 0.0
        %707 = vmatpush1.msra.mxu0 %v540
        %708 = vmatprep.mubr.f32.mxu0 %v502
        %709 = vmatmul.mubr.f32.gmra.mrb[0].mxu0 %v501
        %v710 = vpop.f32.mrb[0].mxu0
        %v711 = vadd.f32 %v642, %v710
        %v712 = vpop.f32.mrb[0].mxu0
        %713 = vdwg.mxu0
        %714 = vmatprep.subr.mxu0 0.0
        %715 = vmatpush1.msra.mxu0 %v541
        %716 = vmatprep.subr.mxu0 0.0
        %717 = vmatpush1.msra.mxu0 %v542
        %718 = vmatprep.subr.mxu0 0.0
        %719 = vmatpush1.msra.mxu0 %v543
        %720 = vmatprep.subr.mxu0 0.0
        %721 = vmatpush1.msra.mxu0 %v544
        %722 = vmatprep.subr.mxu0 0.0
        %723 = vmatpush1.msra.mxu0 %v545
        %724 = vmatprep.subr.mxu0 0.0
        %725 = vmatpush1.msra.mxu0 %v546
        %726 = vmatprep.subr.mxu0 0.0
        %727 = vmatpush1.msra.mxu0 %v547
        %728 = vmatprep.subr.mxu0 0.0
        %729 = vmatpush1.msra.mxu0 %v548
        %730 = vmatprep.subr.mxu0 0.0
        %731 = vmatpush1.msra.mxu0 %v549
        %732 = vmatprep.subr.mxu0 0.0
        %733 = vmatpush1.msra.mxu0 %v550
        %734 = vmatprep.subr.mxu0 0.0
        %735 = vmatpush1.msra.mxu0 %v551
        %736 = vmatprep.subr.mxu0 0.0
        %737 = vmatpush1.msra.mxu0 %v552
        %738 = vmatprep.subr.mxu0 0.0
        %739 = vmatpush1.msra.mxu0 %v553
        %740 = vmatprep.subr.mxu0 0.0
        %741 = vmatpush1.msra.mxu0 %v554
        %742 = vmatprep.subr.mxu0 0.0
        %743 = vmatpush1.msra.mxu0 %v555
        %744 = vmatprep.subr.mxu0 0.0
        %745 = vmatpush1.msra.mxu0 %v556
        %746 = vmatprep.subr.mxu0 0.0
        %747 = vmatpush1.msra.mxu0 %v557
        %748 = vmatprep.subr.mxu0 0.0
        %749 = vmatpush1.msra.mxu0 %v558
        %750 = vmatprep.subr.mxu0 0.0
        %751 = vmatpush1.msra.mxu0 %v559
        %752 = vmatprep.subr.mxu0 0.0
        %753 = vmatpush1.msra.mxu0 %v560
        %754 = vmatprep.subr.mxu0 0.0
        %755 = vmatpush1.msra.mxu0 %v561
        %756 = vmatprep.subr.mxu0 0.0
        %757 = vmatpush1.msra.mxu0 %v562
        %758 = vmatprep.subr.mxu0 0.0
        %759 = vmatpush1.msra.mxu0 %v563
        %760 = vmatprep.subr.mxu0 0.0
        %761 = vmatpush1.msra.mxu0 %v564
        %762 = vmatprep.subr.mxu0 0.0
        %763 = vmatpush1.msra.mxu0 %v565
        %764 = vmatprep.subr.mxu0 0.0
        %765 = vmatpush1.msra.mxu0 %v566
        %766 = vmatprep.subr.mxu0 0.0
        %767 = vmatpush1.msra.mxu0 %v567
        %768 = vmatprep.subr.mxu0 0.0
        %769 = vmatpush1.msra.mxu0 %v568
        %770 = vmatprep.subr.mxu0 0.0
        %771 = vmatpush1.msra.mxu0 %v569
        %772 = vmatprep.subr.mxu0 0.0
        %773 = vmatpush1.msra.mxu0 %v570
        %774 = vmatprep.subr.mxu0 0.0
        %775 = vmatpush1.msra.mxu0 %v571
        %776 = vmatprep.subr.mxu0 0.0
        %777 = vmatpush1.msra.mxu0 %v572
        %778 = vmatprep.mubr.f32.mxu0 %v504
        %779 = vmatmul.mubr.f32.gmra.mrb[0].mxu0 %v503
        %v780 = vpop.f32.mrb[0].mxu0
        %v781 = vadd.f32 %v711, %v780
        %v782 = vpop.f32.mrb[0].mxu0
        %783 = vdwg.mxu0
        %784 = vmatprep.subr.mxu0 0.0
        %785 = vmatpush1.msra.mxu0 %v573
        %786 = vmatprep.subr.mxu0 0.0
        %787 = vmatpush1.msra.mxu0 %v574
        %788 = vmatprep.subr.mxu0 0.0
        %789 = vmatpush1.msra.mxu0 %v575
        %790 = vmatprep.subr.mxu0 0.0
        %791 = vmatpush1.msra.mxu0 %v576
        %792 = vmatprep.subr.mxu0 0.0
        %793 = vmatpush1.msra.mxu0 %v577
        %794 = vmatprep.subr.mxu0 0.0
        %795 = vmatpush1.msra.mxu0 %v578
        %796 = vmatprep.subr.mxu0 0.0
        %797 = vmatpush1.msra.mxu0 %v579
        %798 = vmatprep.subr.mxu0 0.0
        %799 = vmatpush1.msra.mxu0 %v580
        %800 = vmatprep.subr.mxu0 0.0
        %801 = vmatpush1.msra.mxu0 %v581
        %802 = vmatprep.subr.mxu0 0.0
        %803 = vmatpush1.msra.mxu0 %v582
        %804 = vmatprep.subr.mxu0 0.0
        %805 = vmatpush1.msra.mxu0 %v583
        %806 = vmatprep.subr.mxu0 0.0
        %807 = vmatpush1.msra.mxu0 %v584
        %808 = vmatprep.subr.mxu0 0.0
        %809 = vmatpush1.msra.mxu0 %v585
        %810 = vmatprep.subr.mxu0 0.0
        %811 = vmatpush1.msra.mxu0 %v586
        %812 = vmatprep.subr.mxu0 0.0
        %813 = vmatpush1.msra.mxu0 %v587
        %814 = vmatprep.subr.mxu0 0.0
        %815 = vmatpush1.msra.mxu0 %v588
        %816 = vmatprep.subr.mxu0 0.0
        %817 = vmatpush1.msra.mxu0 %v589
        %818 = vmatprep.subr.mxu0 0.0
        %819 = vmatpush1.msra.mxu0 %v590
        %820 = vmatprep.subr.mxu0 0.0
        %821 = vmatpush1.msra.mxu0 %v591
        %822 = vmatprep.subr.mxu0 0.0
        %823 = vmatpush1.msra.mxu0 %v592
        %824 = vmatprep.subr.mxu0 0.0
        %825 = vmatpush1.msra.mxu0 %v593
        %826 = vmatprep.subr.mxu0 0.0
        %827 = vmatpush1.msra.mxu0 %v594
        %828 = vmatprep.subr.mxu0 0.0
        %829 = vmatpush1.msra.mxu0 %v595
        %830 = vmatprep.subr.mxu0 0.0
        %831 = vmatpush1.msra.mxu0 %v596
        %832 = vmatprep.subr.mxu0 0.0
        %833 = vmatpush1.msra.mxu0 %v597
        %834 = vmatprep.subr.mxu0 0.0
        %835 = vmatpush1.msra.mxu0 %v598
        %836 = vmatprep.subr.mxu0 0.0
        %837 = vmatpush1.msra.mxu0 %v599
        %838 = vmatprep.subr.mxu0 0.0
        %839 = vmatpush1.msra.mxu0 %v600
        %840 = vmatprep.subr.mxu0 0.0
        %841 = vmatpush1.msra.mxu0 %v601
        %842 = vmatprep.subr.mxu0 0.0
        %843 = vmatpush1.msra.mxu0 %v602
        %844 = vmatprep.subr.mxu0 0.0
        %845 = vmatpush1.msra.mxu0 %v603
        %846 = vmatprep.subr.mxu0 0.0
        %847 = vmatpush1.msra.mxu0 %v604
        %848 = vmatprep.mubr.f32.mxu0 %v506
        %849 = vmatmul.mubr.f32.gmra.mrb[0].mxu0 %v505
        %v850 = vpop.f32.mrb[0].mxu0
        %v851 = vadd.f32 %v781, %v850
        %v852 = vpop.f32.mrb[0].mxu0
        %853 = vdwg.mxu0
        %854 = vmatprep.subr.mxu0 0.0
        %855 = vmatpush1.msra.mxu0 %v605
        %856 = vmatprep.subr.mxu0 0.0
        %857 = vmatpush1.msra.mxu0 %v606
        %858 = vmatprep.subr.mxu0 0.0
        %859 = vmatpush1.msra.mxu0 %v607
        %860 = vmatprep.subr.mxu0 0.0
        %861 = vmatpush1.msra.mxu0 %v608
        %862 = vmatprep.subr.mxu0 0.0
        %863 = vmatpush1.msra.mxu0 %v609
        %864 = vmatprep.subr.mxu0 0.0
        %865 = vmatpush1.msra.mxu0 %v610
        %866 = vmatprep.subr.mxu0 0.0
        %867 = vmatpush1.msra.mxu0 %v611
        %868 = vmatprep.subr.mxu0 0.0
        %869 = vmatpush1.msra.mxu0 %v612
        %870 = vmatprep.subr.mxu0 0.0
        %871 = vmatpush1.msra.mxu0 %v613
        %872 = vmatprep.subr.mxu0 0.0
        %873 = vmatpush1.msra.mxu0 %v614
        %874 = vmatprep.subr.mxu0 0.0
        %875 = vmatpush1.msra.mxu0 %v615
        %876 = vmatprep.subr.mxu0 0.0
        %877 = vmatpush1.msra.mxu0 %v616
        %878 = vmatprep.subr.mxu0 0.0
        %879 = vmatpush1.msra.mxu0 %v617
        %880 = vmatprep.subr.mxu0 0.0
        %881 = vmatpush1.msra.mxu0 %v618
        %882 = vmatprep.subr.mxu0 0.0
        %883 = vmatpush1.msra.mxu0 %v619
        %884 = vmatprep.subr.mxu0 0.0
        %885 = vmatpush1.msra.mxu0 %v620
        %886 = vmatprep.subr.mxu0 0.0
        %887 = vmatpush1.msra.mxu0 %v621
        %888 = vmatprep.subr.mxu0 0.0
        %889 = vmatpush1.msra.mxu0 %v622
        %890 = vmatprep.subr.mxu0 0.0
        %891 = vmatpush1.msra.mxu0 %v623
        %892 = vmatprep.subr.mxu0 0.0
        %893 = vmatpush1.msra.mxu0 %v624
        %894 = vmatprep.subr.mxu0 0.0
        %895 = vmatpush1.msra.mxu0 %v625
        %896 = vmatprep.subr.mxu0 0.0
        %897 = vmatpush1.msra.mxu0 %v626
        %898 = vmatprep.subr.mxu0 0.0
        %899 = vmatpush1.msra.mxu0 %v627
        %900 = vmatprep.subr.mxu0 0.0
        %901 = vmatpush1.msra.mxu0 %v628
        %902 = vmatprep.subr.mxu0 0.0
        %903 = vmatpush1.msra.mxu0 %v629
        %904 = vmatprep.subr.mxu0 0.0
        %905 = vmatpush1.msra.mxu0 %v630
        %906 = vmatprep.subr.mxu0 0.0
        %907 = vmatpush1.msra.mxu0 %v631
        %908 = vmatprep.subr.mxu0 0.0
        %909 = vmatpush1.msra.mxu0 %v632
        %910 = vmatprep.subr.mxu0 0.0
        %911 = vmatpush1.msra.mxu0 %v633
        %912 = vmatprep.subr.mxu0 0.0
        %913 = vmatpush1.msra.mxu0 %v634
        %914 = vmatprep.subr.mxu0 0.0
        %915 = vmatpush1.msra.mxu0 %v635
        %916 = vmatprep.subr.mxu0 0.0
        %917 = vmatpush1.msra.mxu0 %v636
        %918 = vmatprep.mubr.f32.mxu0 %v508
        %919 = vmatmul.mubr.f32.gmra.mrb[0].mxu0 %v507
        %v920 = vpop.f32.mrb[0].mxu0
        %v921 = vadd.f32 %v851, %v920
        %v922 = vpop.f32.mrb[0].mxu0
        %923 = vdwg.mxu0
        %v924 = vmax.f32 %v921, 0.0
        %v925 = vld [vmem:[%s412] sm:$0xff]
        %v926 = vld [vmem:[%s412 + $0x8] sm:$0xff]
        %v927 = vld [vmem:[%s412 + $0x10] sm:$0xff]
        %v928 = vld [vmem:[%s412 + $0x18] sm:$0xff]
        %v929 = vld [vmem:[%s412 + $0x20] sm:$0xff]
        %v930 = vld [vmem:[%s412 + $0x28] sm:$0xff]
        %v931 = vld [vmem:[%s412 + $0x30] sm:$0xff]
        %v932 = vld [vmem:[%s412 + $0x38] sm:$0xff]
        %v933 = vld [vmem:[%s412 + $0x40] sm:$0xff]
        %v934 = vld [vmem:[%s412 + $0x48] sm:$0xff]
        %v935 = vld [vmem:[%s412 + $0x50] sm:$0xff]
        %v936 = vld [vmem:[%s412 + $0x58] sm:$0xff]
        %v937 = vld [vmem:[%s412 + $0x60] sm:$0xff]
        %v938 = vld [vmem:[%s412 + $0x68] sm:$0xff]
        %v939 = vld [vmem:[%s412 + $0x70] sm:$0xff]
        %v940 = vld [vmem:[%s412 + $0x78] sm:$0xff]
        %v941 = vld [vmem:[%s412 + $0x80] sm:$0xff]
        %v942 = vld [vmem:[%s412 + $0x88] sm:$0xff]
        %v943 = vld [vmem:[%s412 + $0x90] sm:$0xff]
        %v944 = vld [vmem:[%s412 + $0x98] sm:$0xff]
        %v945 = vld [vmem:[%s412 + $0xa0] sm:$0xff]
        %v946 = vld [vmem:[%s412 + $0xa8] sm:$0xff]
        %v947 = vld [vmem:[%s412 + $0xb0] sm:$0xff]
        %v948 = vld [vmem:[%s412 + $0xb8] sm:$0xff]
        %v949 = vld [vmem:[%s412 + $0xc0] sm:$0xff]
        %v950 = vld [vmem:[%s412 + $0xc8] sm:$0xff]
        %v951 = vld [vmem:[%s412 + $0xd0] sm:$0xff]
        %v952 = vld [vmem:[%s412 + $0xd8] sm:$0xff]
        %v953 = vld [vmem:[%s412 + $0xe0] sm:$0xff]
        %v954 = vld [vmem:[%s412 + $0xe8] sm:$0xff]
        %v955 = vld [vmem:[%s412 + $0xf0] sm:$0xff]
        %v956 = vld [vmem:[%s412 + $0xf8] sm:$0xff]
        %v957 = vld [vmem:[%s412 + $0x100] sm:$0xff]
        %v958 = vld [vmem:[%s412 + $0x108] sm:$0xff]
        %v959 = vld [vmem:[%s412 + $0x110] sm:$0xff]
        %v960 = vld [vmem:[%s412 + $0x118] sm:$0xff]
        %v961 = vld [vmem:[%s412 + $0x120] sm:$0xff]
        %v962 = vld [vmem:[%s412 + $0x128] sm:$0xff]
        %v963 = vld [vmem:[%s412 + $0x130] sm:$0xff]
        %v964 = vld [vmem:[%s412 + $0x138] sm:$0xff]
        %v965 = vld [vmem:[%s412 + $0x140] sm:$0xff]
        %v966 = vld [vmem:[%s412 + $0x148] sm:$0xff]
        %v967 = vld [vmem:[%s412 + $0x150] sm:$0xff]
        %v968 = vld [vmem:[%s412 + $0x158] sm:$0xff]
        %v969 = vld [vmem:[%s412 + $0x160] sm:$0xff]
        %v970 = vld [vmem:[%s412 + $0x168] sm:$0xff]
        %v971 = vld [vmem:[%s412 + $0x170] sm:$0xff]
        %v972 = vld [vmem:[%s412 + $0x178] sm:$0xff]
        %v973 = vld [vmem:[%s412 + $0x180] sm:$0xff]
        %v974 = vld [vmem:[%s412 + $0x188] sm:$0xff]
        %v975 = vld [vmem:[%s412 + $0x190] sm:$0xff]
        %v976 = vld [vmem:[%s412 + $0x198] sm:$0xff]
        %v977 = vld [vmem:[%s412 + $0x1a0] sm:$0xff]
        %v978 = vld [vmem:[%s412 + $0x1a8] sm:$0xff]
        %v979 = vld [vmem:[%s412 + $0x1b0] sm:$0xff]
        %v980 = vld [vmem:[%s412 + $0x1b8] sm:$0xff]
        %v981 = vld [vmem:[%s412 + $0x1c0] sm:$0xff]
        %v982 = vld [vmem:[%s412 + $0x1c8] sm:$0xff]
        %v983 = vld [vmem:[%s412 + $0x1d0] sm:$0xff]
        %v984 = vld [vmem:[%s412 + $0x1d8] sm:$0xff]
        %v985 = vld [vmem:[%s412 + $0x1e0] sm:$0xff]
        %v986 = vld [vmem:[%s412 + $0x1e8] sm:$0xff]
        %v987 = vld [vmem:[%s412 + $0x1f0] sm:$0xff]
        %v988 = vld [vmem:[%s412 + $0x1f8] sm:$0xff]
        %v989 = vld [vmem:[%s412 + $0x200] sm:$0xff]
        %v990 = vld [vmem:[%s412 + $0x208] sm:$0xff]
        %v991 = vld [vmem:[%s412 + $0x210] sm:$0xff]
        %v992 = vld [vmem:[%s412 + $0x218] sm:$0xff]
        %v993 = vld [vmem:[%s412 + $0x220] sm:$0xff]
        %v994 = vld [vmem:[%s412 + $0x228] sm:$0xff]
        %v995 = vld [vmem:[%s412 + $0x230] sm:$0xff]
        %v996 = vld [vmem:[%s412 + $0x238] sm:$0xff]
        %v997 = vld [vmem:[%s412 + $0x240] sm:$0xff]
        %v998 = vld [vmem:[%s412 + $0x248] sm:$0xff]
        %v999 = vld [vmem:[%s412 + $0x250] sm:$0xff]
        %v1000 = vld [vmem:[%s412 + $0x258] sm:$0xff]
        %v1001 = vld [vmem:[%s412 + $0x260] sm:$0xff]
        %v1002 = vld [vmem:[%s412 + $0x268] sm:$0xff]
        %v1003 = vld [vmem:[%s412 + $0x270] sm:$0xff]
        %v1004 = vld [vmem:[%s412 + $0x278] sm:$0xff]
        %v1005 = vld [vmem:[%s412 + $0x280] sm:$0xff]
        %v1006 = vld [vmem:[%s412 + $0x288] sm:$0xff]
        %v1007 = vld [vmem:[%s412 + $0x290] sm:$0xff]
        %v1008 = vld [vmem:[%s412 + $0x298] sm:$0xff]
        %v1009 = vld [vmem:[%s412 + $0x2a0] sm:$0xff]
        %v1010 = vld [vmem:[%s412 + $0x2a8] sm:$0xff]
        %v1011 = vld [vmem:[%s412 + $0x2b0] sm:$0xff]
        %v1012 = vld [vmem:[%s412 + $0x2b8] sm:$0xff]
        %v1013 = vld [vmem:[%s412 + $0x2c0] sm:$0xff]
        %v1014 = vld [vmem:[%s412 + $0x2c8] sm:$0xff]
        %v1015 = vld [vmem:[%s412 + $0x2d0] sm:$0xff]
        %v1016 = vld [vmem:[%s412 + $0x2d8] sm:$0xff]
        %v1017 = vld [vmem:[%s412 + $0x2e0] sm:$0xff]
        %v1018 = vld [vmem:[%s412 + $0x2e8] sm:$0xff]
        %v1019 = vld [vmem:[%s412 + $0x2f0] sm:$0xff]
        %v1020 = vld [vmem:[%s412 + $0x2f8] sm:$0xff]
        %v1021 = vld [vmem:[%s412 + $0x300] sm:$0xff]
        %v1022 = vld [vmem:[%s412 + $0x308] sm:$0xff]
        %v1023 = vld [vmem:[%s412 + $0x310] sm:$0xff]
        %v1024 = vld [vmem:[%s412 + $0x318] sm:$0xff]
        %v1025 = vld [vmem:[%s412 + $0x320] sm:$0xff]
        %v1026 = vld [vmem:[%s412 + $0x328] sm:$0xff]
        %v1027 = vld [vmem:[%s412 + $0x330] sm:$0xff]
        %v1028 = vld [vmem:[%s412 + $0x338] sm:$0xff]
        %v1029 = vld [vmem:[%s412 + $0x340] sm:$0xff]
        %v1030 = vld [vmem:[%s412 + $0x348] sm:$0xff]
        %v1031 = vld [vmem:[%s412 + $0x350] sm:$0xff]
        %v1032 = vld [vmem:[%s412 + $0x358] sm:$0xff]
        %v1033 = vld [vmem:[%s412 + $0x360] sm:$0xff]
        %v1034 = vld [vmem:[%s412 + $0x368] sm:$0xff]
        %v1035 = vld [vmem:[%s412 + $0x370] sm:$0xff]
        %v1036 = vld [vmem:[%s412 + $0x378] sm:$0xff]
        %v1037 = vld [vmem:[%s412 + $0x380] sm:$0xff]
        %v1038 = vld [vmem:[%s412 + $0x388] sm:$0xff]
        %v1039 = vld [vmem:[%s412 + $0x390] sm:$0xff]
        %v1040 = vld [vmem:[%s412 + $0x398] sm:$0xff]
        %v1041 = vld [vmem:[%s412 + $0x3a0] sm:$0xff]
        %v1042 = vld [vmem:[%s412 + $0x3a8] sm:$0xff]
        %v1043 = vld [vmem:[%s412 + $0x3b0] sm:$0xff]
        %v1044 = vld [vmem:[%s412 + $0x3b8] sm:$0xff]
        %v1045 = vld [vmem:[%s412 + $0x3c0] sm:$0xff]
        %v1046 = vld [vmem:[%s412 + $0x3c8] sm:$0xff]
        %v1047 = vld [vmem:[%s412 + $0x3d0] sm:$0xff]
        %v1048 = vld [vmem:[%s412 + $0x3d8] sm:$0xff]
        %v1049 = vld [vmem:[%s412 + $0x3e0] sm:$0xff]
        %v1050 = vld [vmem:[%s412 + $0x3e8] sm:$0xff]
        %v1051 = vld [vmem:[%s412 + $0x3f0] sm:$0xff]
        %v1052 = vld [vmem:[%s412 + $0x3f8] sm:$0xff]
        %v1053 = vld [vmem:[%s421] sm:$0xff]
        %v1055 = vlaneseq
        %v1056 = vshrl.u32 %v1055, 7
        %v1057 = vsub.s32 0, %v1056
        %v1058 = vrot.slane %v1053, %v1057
        %v1059 = vlaneseq
        %v1060 = vshrl.u32 %v1059, 7
        %v1061 = vsub.s32 1, %v1060
        %v1062 = vrot.slane %v1053, %v1061
        %v1063 = vlaneseq
        %v1064 = vshrl.u32 %v1063, 7
        %v1065 = vsub.s32 2, %v1064
        %v1066 = vrot.slane %v1053, %v1065
        %v1067 = vlaneseq
        %v1068 = vshrl.u32 %v1067, 7
        %v1069 = vsub.s32 3, %v1068
        %v1070 = vrot.slane %v1053, %v1069
        %v1071 = vlaneseq
        %v1072 = vshrl.u32 %v1071, 7
        %v1073 = vsub.s32 4, %v1072
        %v1074 = vrot.slane %v1053, %v1073
        %v1075 = vlaneseq
        %v1076 = vshrl.u32 %v1075, 7
        %v1077 = vsub.s32 5, %v1076
        %v1078 = vrot.slane %v1053, %v1077
        %v1079 = vlaneseq
        %v1080 = vshrl.u32 %v1079, 7
        %v1081 = vsub.s32 6, %v1080
        %v1082 = vrot.slane %v1053, %v1081
        %v1083 = vlaneseq
        %v1084 = vshrl.u32 %v1083, 7
        %v1085 = vsub.s32 7, %v1084
        %v1086 = vrot.slane %v1053, %v1085
        %1095 = vmatprep.subr.mxu0 %v926
        %1096 = vmatpush1.msra.mxu0 %v925
        %1097 = vmatprep.subr.mxu0 %v934
        %1098 = vmatpush1.msra.mxu0 %v933
        %1099 = vmatprep.subr.mxu0 %v942
        %1100 = vmatpush1.msra.mxu0 %v941
        %1101 = vmatprep.subr.mxu0 %v950
        %1102 = vmatpush1.msra.mxu0 %v949
        %1103 = vmatprep.subr.mxu0 %v958
        %1104 = vmatpush1.msra.mxu0 %v957
        %1105 = vmatprep.subr.mxu0 %v966
        %1106 = vmatpush1.msra.mxu0 %v965
        %1107 = vmatprep.subr.mxu0 %v974
        %1108 = vmatpush1.msra.mxu0 %v973
        %1109 = vmatprep.subr.mxu0 %v982
        %1110 = vmatpush1.msra.mxu0 %v981
        %1111 = vmatprep.subr.mxu0 %v990
        %1112 = vmatpush1.msra.mxu0 %v989
        %1113 = vmatprep.subr.mxu0 %v998
        %1114 = vmatpush1.msra.mxu0 %v997
        %1115 = vmatprep.subr.mxu0 %v1006
        %1116 = vmatpush1.msra.mxu0 %v1005
        %1117 = vmatprep.subr.mxu0 %v1014
        %1118 = vmatpush1.msra.mxu0 %v1013
        %1119 = vmatprep.subr.mxu0 %v1022
        %1120 = vmatpush1.msra.mxu0 %v1021
        %1121 = vmatprep.subr.mxu0 %v1030
        %1122 = vmatpush1.msra.mxu0 %v1029
        %1123 = vmatprep.subr.mxu0 %v1038
        %1124 = vmatpush1.msra.mxu0 %v1037
        %1125 = vmatprep.subr.mxu0 %v1046
        %1126 = vmatpush1.msra.mxu0 %v1045
        %1127 = vmatprep.subr.mxu0 0.0
        %1128 = vmatpush1.msra.mxu0 0.0
        %1129 = vmatprep.subr.mxu0 0.0
        %1130 = vmatpush1.msra.mxu0 0.0
        %1131 = vmatprep.subr.mxu0 0.0
        %1132 = vmatpush1.msra.mxu0 0.0
        %1133 = vmatprep.subr.mxu0 0.0
        %1134 = vmatpush1.msra.mxu0 0.0
        %1135 = vmatprep.subr.mxu0 0.0
        %1136 = vmatpush1.msra.mxu0 0.0
        %1137 = vmatprep.subr.mxu0 0.0
        %1138 = vmatpush1.msra.mxu0 0.0
        %1139 = vmatprep.subr.mxu0 0.0
        %1140 = vmatpush1.msra.mxu0 0.0
        %1141 = vmatprep.subr.mxu0 0.0
        %1142 = vmatpush1.msra.mxu0 0.0
        %1143 = vmatprep.subr.mxu0 0.0
        %1144 = vmatpush1.msra.mxu0 0.0
        %1145 = vmatprep.subr.mxu0 0.0
        %1146 = vmatpush1.msra.mxu0 0.0
        %1147 = vmatprep.subr.mxu0 0.0
        %1148 = vmatpush1.msra.mxu0 0.0
        %1149 = vmatprep.subr.mxu0 0.0
        %1150 = vmatpush1.msra.mxu0 0.0
        %1151 = vmatprep.subr.mxu0 0.0
        %1152 = vmatpush1.msra.mxu0 0.0
        %1153 = vmatprep.subr.mxu0 0.0
        %1154 = vmatpush1.msra.mxu0 0.0
        %1155 = vmatprep.subr.mxu0 0.0
        %1156 = vmatpush1.msra.mxu0 0.0
        %1157 = vmatprep.subr.mxu0 0.0
        %1158 = vmatpush1.msra.mxu0 0.0
        %1159 = vmatprep.mubr.f32.mxu0 0.0
        %1160 = vmatmul.mubr.f32.gmra.mrb[0].mxu0 %v924
        %v1161 = vpop.f32.mrb[0].mxu0
        %v1162 = vadd.f32 %v1058, %v1161
        %v1163 = vpop.f32.mrb[0].mxu0
        %v1164 = vadd.f32 %v1062, %v1163
        %1165 = vdwg.mxu0
        %1166 = vmatprep.subr.mxu0 %v928
        %1167 = vmatpush1.msra.mxu0 %v927
        %1168 = vmatprep.subr.mxu0 %v936
        %1169 = vmatpush1.msra.mxu0 %v935
        %1170 = vmatprep.subr.mxu0 %v944
        %1171 = vmatpush1.msra.mxu0 %v943
        %1172 = vmatprep.subr.mxu0 %v952
        %1173 = vmatpush1.msra.mxu0 %v951
        %1174 = vmatprep.subr.mxu0 %v960
        %1175 = vmatpush1.msra.mxu0 %v959
        %1176 = vmatprep.subr.mxu0 %v968
        %1177 = vmatpush1.msra.mxu0 %v967
        %1178 = vmatprep.subr.mxu0 %v976
        %1179 = vmatpush1.msra.mxu0 %v975
        %1180 = vmatprep.subr.mxu0 %v984
        %1181 = vmatpush1.msra.mxu0 %v983
        %1182 = vmatprep.subr.mxu0 %v992
        %1183 = vmatpush1.msra.mxu0 %v991
        %1184 = vmatprep.subr.mxu0 %v1000
        %1185 = vmatpush1.msra.mxu0 %v999
        %1186 = vmatprep.subr.mxu0 %v1008
        %1187 = vmatpush1.msra.mxu0 %v1007
        %1188 = vmatprep.subr.mxu0 %v1016
        %1189 = vmatpush1.msra.mxu0 %v1015
        %1190 = vmatprep.subr.mxu0 %v1024
        %1191 = vmatpush1.msra.mxu0 %v1023
        %1192 = vmatprep.subr.mxu0 %v1032
        %1193 = vmatpush1.msra.mxu0 %v1031
        %1194 = vmatprep.subr.mxu0 %v1040
        %1195 = vmatpush1.msra.mxu0 %v1039
        %1196 = vmatprep.subr.mxu0 %v1048
        %1197 = vmatpush1.msra.mxu0 %v1047
        %1198 = vmatprep.subr.mxu0 0.0
        %1199 = vmatpush1.msra.mxu0 0.0
        %1200 = vmatprep.subr.mxu0 0.0
        %1201 = vmatpush1.msra.mxu0 0.0
        %1202 = vmatprep.subr.mxu0 0.0
        %1203 = vmatpush1.msra.mxu0 0.0
        %1204 = vmatprep.subr.mxu0 0.0
        %1205 = vmatpush1.msra.mxu0 0.0
        %1206 = vmatprep.subr.mxu0 0.0
        %1207 = vmatpush1.msra.mxu0 0.0
        %1208 = vmatprep.subr.mxu0 0.0
        %1209 = vmatpush1.msra.mxu0 0.0
        %1210 = vmatprep.subr.mxu0 0.0
        %1211 = vmatpush1.msra.mxu0 0.0
        %1212 = vmatprep.subr.mxu0 0.0
        %1213 = vmatpush1.msra.mxu0 0.0
        %1214 = vmatprep.subr.mxu0 0.0
        %1215 = vmatpush1.msra.mxu0 0.0
        %1216 = vmatprep.subr.mxu0 0.0
        %1217 = vmatpush1.msra.mxu0 0.0
        %1218 = vmatprep.subr.mxu0 0.0
        %1219 = vmatpush1.msra.mxu0 0.0
        %1220 = vmatprep.subr.mxu0 0.0
        %1221 = vmatpush1.msra.mxu0 0.0
        %1222 = vmatprep.subr.mxu0 0.0
        %1223 = vmatpush1.msra.mxu0 0.0
        %1224 = vmatprep.subr.mxu0 0.0
        %1225 = vmatpush1.msra.mxu0 0.0
        %1226 = vmatprep.subr.mxu0 0.0
        %1227 = vmatpush1.msra.mxu0 0.0
        %1228 = vmatprep.subr.mxu0 0.0
        %1229 = vmatpush1.msra.mxu0 0.0
        %1230 = vmatprep.mubr.f32.mxu0 0.0
        %1231 = vmatmul.mubr.f32.gmra.mrb[0].mxu0 %v924
        %v1232 = vpop.f32.mrb[0].mxu0
        %v1233 = vadd.f32 %v1066, %v1232
        %v1234 = vpop.f32.mrb[0].mxu0
        %v1235 = vadd.f32 %v1070, %v1234
        %1236 = vdwg.mxu0
        %1237 = vmatprep.subr.mxu0 %v930
        %1238 = vmatpush1.msra.mxu0 %v929
        %1239 = vmatprep.subr.mxu0 %v938
        %1240 = vmatpush1.msra.mxu0 %v937
        %1241 = vmatprep.subr.mxu0 %v946
        %1242 = vmatpush1.msra.mxu0 %v945
        %1243 = vmatprep.subr.mxu0 %v954
        %1244 = vmatpush1.msra.mxu0 %v953
        %1245 = vmatprep.subr.mxu0 %v962
        %1246 = vmatpush1.msra.mxu0 %v961
        %1247 = vmatprep.subr.mxu0 %v970
        %1248 = vmatpush1.msra.mxu0 %v969
        %1249 = vmatprep.subr.mxu0 %v978
        %1250 = vmatpush1.msra.mxu0 %v977
        %1251 = vmatprep.subr.mxu0 %v986
        %1252 = vmatpush1.msra.mxu0 %v985
        %1253 = vmatprep.subr.mxu0 %v994
        %1254 = vmatpush1.msra.mxu0 %v993
        %1255 = vmatprep.subr.mxu0 %v1002
        %1256 = vmatpush1.msra.mxu0 %v1001
        %1257 = vmatprep.subr.mxu0 %v1010
        %1258 = vmatpush1.msra.mxu0 %v1009
        %1259 = vmatprep.subr.mxu0 %v1018
        %1260 = vmatpush1.msra.mxu0 %v1017
        %1261 = vmatprep.subr.mxu0 %v1026
        %1262 = vmatpush1.msra.mxu0 %v1025
        %1263 = vmatprep.subr.mxu0 %v1034
        %1264 = vmatpush1.msra.mxu0 %v1033
        %1265 = vmatprep.subr.mxu0 %v1042
        %1266 = vmatpush1.msra.mxu0 %v1041
        %1267 = vmatprep.subr.mxu0 %v1050
        %1268 = vmatpush1.msra.mxu0 %v1049
        %1269 = vmatprep.subr.mxu0 0.0
        %1270 = vmatpush1.msra.mxu0 0.0
        %1271 = vmatprep.subr.mxu0 0.0
        %1272 = vmatpush1.msra.mxu0 0.0
        %1273 = vmatprep.subr.mxu0 0.0
        %1274 = vmatpush1.msra.mxu0 0.0
        %1275 = vmatprep.subr.mxu0 0.0
        %1276 = vmatpush1.msra.mxu0 0.0
        %1277 = vmatprep.subr.mxu0 0.0
        %1278 = vmatpush1.msra.mxu0 0.0
        %1279 = vmatprep.subr.mxu0 0.0
        %1280 = vmatpush1.msra.mxu0 0.0
        %1281 = vmatprep.subr.mxu0 0.0
        %1282 = vmatpush1.msra.mxu0 0.0
        %1283 = vmatprep.subr.mxu0 0.0
        %1284 = vmatpush1.msra.mxu0 0.0
        %1285 = vmatprep.subr.mxu0 0.0
        %1286 = vmatpush1.msra.mxu0 0.0
        %1287 = vmatprep.subr.mxu0 0.0
        %1288 = vmatpush1.msra.mxu0 0.0
        %1289 = vmatprep.subr.mxu0 0.0
        %1290 = vmatpush1.msra.mxu0 0.0
        %1291 = vmatprep.subr.mxu0 0.0
        %1292 = vmatpush1.msra.mxu0 0.0
        %1293 = vmatprep.subr.mxu0 0.0
        %1294 = vmatpush1.msra.mxu0 0.0
        %1295 = vmatprep.subr.mxu0 0.0
        %1296 = vmatpush1.msra.mxu0 0.0
        %1297 = vmatprep.subr.mxu0 0.0
        %1298 = vmatpush1.msra.mxu0 0.0
        %1299 = vmatprep.subr.mxu0 0.0
        %1300 = vmatpush1.msra.mxu0 0.0
        %1301 = vmatprep.mubr.f32.mxu0 0.0
        %1302 = vmatmul.mubr.f32.gmra.mrb[0].mxu0 %v924
        %v1303 = vpop.f32.mrb[0].mxu0
        %v1304 = vadd.f32 %v1074, %v1303
        %v1305 = vpop.f32.mrb[0].mxu0
        %v1306 = vadd.f32 %v1078, %v1305
        %1307 = vdwg.mxu0
        %1308 = vmatprep.subr.mxu0 %v932
        %1309 = vmatpush1.msra.mxu0 %v931
        %1310 = vmatprep.subr.mxu0 %v940
        %1311 = vmatpush1.msra.mxu0 %v939
        %1312 = vmatprep.subr.mxu0 %v948
        %1313 = vmatpush1.msra.mxu0 %v947
        %1314 = vmatprep.subr.mxu0 %v956
        %1315 = vmatpush1.msra.mxu0 %v955
        %1316 = vmatprep.subr.mxu0 %v964
        %1317 = vmatpush1.msra.mxu0 %v963
        %1318 = vmatprep.subr.mxu0 %v972
        %1319 = vmatpush1.msra.mxu0 %v971
        %1320 = vmatprep.subr.mxu0 %v980
        %1321 = vmatpush1.msra.mxu0 %v979
        %1322 = vmatprep.subr.mxu0 %v988
        %1323 = vmatpush1.msra.mxu0 %v987
        %1324 = vmatprep.subr.mxu0 %v996
        %1325 = vmatpush1.msra.mxu0 %v995
        %1326 = vmatprep.subr.mxu0 %v1004
        %1327 = vmatpush1.msra.mxu0 %v1003
        %1328 = vmatprep.subr.mxu0 %v1012
        %1329 = vmatpush1.msra.mxu0 %v1011
        %1330 = vmatprep.subr.mxu0 %v1020
        %1331 = vmatpush1.msra.mxu0 %v1019
        %1332 = vmatprep.subr.mxu0 %v1028
        %1333 = vmatpush1.msra.mxu0 %v1027
        %1334 = vmatprep.subr.mxu0 %v1036
        %1335 = vmatpush1.msra.mxu0 %v1035
        %1336 = vmatprep.subr.mxu0 %v1044
        %1337 = vmatpush1.msra.mxu0 %v1043
        %1338 = vmatprep.subr.mxu0 %v1052
        %1339 = vmatpush1.msra.mxu0 %v1051
        %1340 = vmatprep.subr.mxu0 0.0
        %1341 = vmatpush1.msra.mxu0 0.0
        %1342 = vmatprep.subr.mxu0 0.0
        %1343 = vmatpush1.msra.mxu0 0.0
        %1344 = vmatprep.subr.mxu0 0.0
        %1345 = vmatpush1.msra.mxu0 0.0
        %1346 = vmatprep.subr.mxu0 0.0
        %1347 = vmatpush1.msra.mxu0 0.0
        %1348 = vmatprep.subr.mxu0 0.0
        %1349 = vmatpush1.msra.mxu0 0.0
        %1350 = vmatprep.subr.mxu0 0.0
        %1351 = vmatpush1.msra.mxu0 0.0
        %1352 = vmatprep.subr.mxu0 0.0
        %1353 = vmatpush1.msra.mxu0 0.0
        %1354 = vmatprep.subr.mxu0 0.0
        %1355 = vmatpush1.msra.mxu0 0.0
        %1356 = vmatprep.subr.mxu0 0.0
        %1357 = vmatpush1.msra.mxu0 0.0
        %1358 = vmatprep.subr.mxu0 0.0
        %1359 = vmatpush1.msra.mxu0 0.0
        %1360 = vmatprep.subr.mxu0 0.0
        %1361 = vmatpush1.msra.mxu0 0.0
        %1362 = vmatprep.subr.mxu0 0.0
        %1363 = vmatpush1.msra.mxu0 0.0
        %1364 = vmatprep.subr.mxu0 0.0
        %1365 = vmatpush1.msra.mxu0 0.0
        %1366 = vmatprep.subr.mxu0 0.0
        %1367 = vmatpush1.msra.mxu0 0.0
        %1368 = vmatprep.subr.mxu0 0.0
        %1369 = vmatpush1.msra.mxu0 0.0
        %1370 = vmatprep.subr.mxu0 0.0
        %1371 = vmatpush1.msra.mxu0 0.0
        %1372 = vmatprep.mubr.f32.mxu0 0.0
        %1373 = vmatmul.mubr.f32.gmra.mrb[0].mxu0 %v924
        %v1374 = vpop.f32.mrb[0].mxu0
        %v1375 = vadd.f32 %v1082, %v1374
        %v1376 = vpop.f32.mrb[0].mxu0
        %v1377 = vadd.f32 %v1086, %v1376
        %1378 = vdwg.mxu0
        %v1379 = vmax.f32 %v1162, 0.0
        %v1380 = vmax.f32 %v1164, 0.0
        %v1381 = vmax.f32 %v1233, 0.0
        %v1382 = vmax.f32 %v1235, 0.0
        %v1383 = vmax.f32 %v1304, 0.0
        %v1384 = vmax.f32 %v1306, 0.0
        %v1385 = vmax.f32 %v1375, 0.0
        %v1386 = vmax.f32 %v1377, 0.0
        %v1387 = vadd.f32 %v501, %v1379
        %v1388 = vadd.f32 %v502, %v1380
        %v1389 = vadd.f32 %v503, %v1381
        %v1390 = vadd.f32 %v504, %v1382
        %v1391 = vadd.f32 %v505, %v1383
        %v1392 = vadd.f32 %v506, %v1384
        %v1393 = vadd.f32 %v507, %v1385
        %v1394 = vadd.f32 %v508, %v1386
        %1395 = vst [vmem:[#allocation2] sm:$0xff] %v1387
        %1396 = vst [vmem:[#allocation2 + $0x8] sm:$0xff] %v1388
        %1397 = vst [vmem:[#allocation2 + $0x10] sm:$0xff] %v1389
        %1398 = vst [vmem:[#allocation2 + $0x18] sm:$0xff] %v1390
        %1399 = vst [vmem:[#allocation2 + $0x20] sm:$0xff] %v1391
        %1400 = vst [vmem:[#allocation2 + $0x28] sm:$0xff] %v1392
        %1401 = vst [vmem:[#allocation2 + $0x30] sm:$0xff] %v1393
        %1402 = vst [vmem:[#allocation2 + $0x38] sm:$0xff] %v1394
        %1403 = vst [vmem:[%s473] sm:$0xff] %v1387
        %1404 = vst [vmem:[%s473 + $0x8] sm:$0xff] %v1388
        %1405 = vst [vmem:[%s473 + $0x10] sm:$0xff] %v1389
        %1406 = vst [vmem:[%s473 + $0x18] sm:$0xff] %v1390
        %1407 = vst [vmem:[%s473 + $0x20] sm:$0xff] %v1391
        %1408 = vst [vmem:[%s473 + $0x28] sm:$0xff] %v1392
        %1409 = vst [vmem:[%s473 + $0x30] sm:$0xff] %v1393
        %1410 = vst [vmem:[%s473 + $0x38] sm:$0xff] %v1394
        %v1411 = vld [vmem:[#allocation12] sm:$0xff]
        %v1412 = vld [vmem:[#allocation12 + $0x8] sm:$0xff]
        %v1413 = vld [vmem:[#allocation12 + $0x10] sm:$0xff]
        %v1414 = vld [vmem:[#allocation12 + $0x18] sm:$0xff]
        %v1415 = vld [vmem:[#allocation12 + $0x20] sm:$0xff]
        %v1416 = vld [vmem:[#allocation12 + $0x28] sm:$0xff]
        %v1417 = vld [vmem:[#allocation12 + $0x30] sm:$0xff]
        %v1418 = vld [vmem:[#allocation12 + $0x38] sm:$0xff]
        %v1419 = vld [vmem:[#allocation12 + $0x40] sm:$0xff]
        %v1420 = vld [vmem:[#allocation12 + $0x48] sm:$0xff]
        %v1421 = vld [vmem:[#allocation12 + $0x50] sm:$0xff]
        %v1422 = vld [vmem:[#allocation12 + $0x58] sm:$0xff]
        %v1423 = vld [vmem:[#allocation12 + $0x60] sm:$0xff]
        %v1424 = vld [vmem:[#allocation12 + $0x68] sm:$0xff]
        %v1425 = vld [vmem:[#allocation12 + $0x70] sm:$0xff]
        %v1426 = vld [vmem:[#allocation12 + $0x78] sm:$0xff]
        %v1427 = vld [vmem:[#allocation12 + $0x80] sm:$0xff]
        %v1428 = vld [vmem:[#allocation12 + $0x88] sm:$0xff]
        %v1429 = vld [vmem:[#allocation12 + $0x90] sm:$0xff]
        %v1430 = vld [vmem:[#allocation12 + $0x98] sm:$0xff]
        %v1431 = vld [vmem:[#allocation12 + $0xa0] sm:$0xff]
        %v1432 = vld [vmem:[#allocation12 + $0xa8] sm:$0xff]
        %v1433 = vld [vmem:[#allocation12 + $0xb0] sm:$0xff]
        %v1434 = vld [vmem:[#allocation12 + $0xb8] sm:$0xff]
        %v1435 = vld [vmem:[#allocation12 + $0xc0] sm:$0xff]
        %v1436 = vld [vmem:[#allocation12 + $0xc8] sm:$0xff]
        %v1437 = vld [vmem:[#allocation12 + $0xd0] sm:$0xff]
        %v1438 = vld [vmem:[#allocation12 + $0xd8] sm:$0xff]
        %v1439 = vld [vmem:[#allocation12 + $0xe0] sm:$0xff]
        %v1440 = vld [vmem:[#allocation12 + $0xe8] sm:$0xff]
        %v1441 = vld [vmem:[#allocation12 + $0xf0] sm:$0xff]
        %v1442 = vld [vmem:[#allocation12 + $0xf8] sm:$0xff]
        %v1443 = vld [vmem:[#allocation12 + $0x100] sm:$0xff]
        %v1444 = vld [vmem:[#allocation12 + $0x108] sm:$0xff]
        %v1445 = vld [vmem:[#allocation12 + $0x110] sm:$0xff]
        %v1446 = vld [vmem:[#allocation12 + $0x118] sm:$0xff]
        %v1447 = vld [vmem:[#allocation12 + $0x120] sm:$0xff]
        %v1448 = vld [vmem:[#allocation12 + $0x128] sm:$0xff]
        %v1449 = vld [vmem:[#allocation12 + $0x130] sm:$0xff]
        %v1450 = vld [vmem:[#allocation12 + $0x138] sm:$0xff]
        %v1451 = vld [vmem:[#allocation12 + $0x140] sm:$0xff]
        %v1452 = vld [vmem:[#allocation12 + $0x148] sm:$0xff]
        %v1453 = vld [vmem:[#allocation12 + $0x150] sm:$0xff]
        %v1454 = vld [vmem:[#allocation12 + $0x158] sm:$0xff]
        %v1455 = vld [vmem:[#allocation12 + $0x160] sm:$0xff]
        %v1456 = vld [vmem:[#allocation12 + $0x168] sm:$0xff]
        %v1457 = vld [vmem:[#allocation12 + $0x170] sm:$0xff]
        %v1458 = vld [vmem:[#allocation12 + $0x178] sm:$0xff]
        %v1459 = vld [vmem:[#allocation12 + $0x180] sm:$0xff]
        %v1460 = vld [vmem:[#allocation12 + $0x188] sm:$0xff]
        %v1461 = vld [vmem:[#allocation12 + $0x190] sm:$0xff]
        %v1462 = vld [vmem:[#allocation12 + $0x198] sm:$0xff]
        %v1463 = vld [vmem:[#allocation12 + $0x1a0] sm:$0xff]
        %v1464 = vld [vmem:[#allocation12 + $0x1a8] sm:$0xff]
        %v1465 = vld [vmem:[#allocation12 + $0x1b0] sm:$0xff]
        %v1466 = vld [vmem:[#allocation12 + $0x1b8] sm:$0xff]
        %v1467 = vld [vmem:[#allocation12 + $0x1c0] sm:$0xff]
        %v1468 = vld [vmem:[#allocation12 + $0x1c8] sm:$0xff]
        %v1469 = vld [vmem:[#allocation12 + $0x1d0] sm:$0xff]
        %v1470 = vld [vmem:[#allocation12 + $0x1d8] sm:$0xff]
        %v1471 = vld [vmem:[#allocation12 + $0x1e0] sm:$0xff]
        %v1472 = vld [vmem:[#allocation12 + $0x1e8] sm:$0xff]
        %v1473 = vld [vmem:[#allocation12 + $0x1f0] sm:$0xff]
        %v1474 = vld [vmem:[#allocation12 + $0x1f8] sm:$0xff]
        %v1475 = vld [vmem:[#allocation12 + $0x200] sm:$0xff]
        %v1476 = vld [vmem:[#allocation12 + $0x208] sm:$0xff]
        %v1477 = vld [vmem:[#allocation12 + $0x210] sm:$0xff]
        %v1478 = vld [vmem:[#allocation12 + $0x218] sm:$0xff]
        %v1479 = vld [vmem:[#allocation12 + $0x220] sm:$0xff]
        %v1480 = vld [vmem:[#allocation12 + $0x228] sm:$0xff]
        %v1481 = vld [vmem:[#allocation12 + $0x230] sm:$0xff]
        %v1482 = vld [vmem:[#allocation12 + $0x238] sm:$0xff]
        %v1483 = vld [vmem:[#allocation12 + $0x240] sm:$0xff]
        %v1484 = vld [vmem:[#allocation12 + $0x248] sm:$0xff]
        %v1485 = vld [vmem:[#allocation12 + $0x250] sm:$0xff]
        %v1486 = vld [vmem:[#allocation12 + $0x258] sm:$0xff]
        %v1487 = vld [vmem:[#allocation12 + $0x260] sm:$0xff]
        %v1488 = vld [vmem:[#allocation12 + $0x268] sm:$0xff]
        %v1489 = vld [vmem:[#allocation12 + $0x270] sm:$0xff]
        %v1490 = vld [vmem:[#allocation12 + $0x278] sm:$0xff]
        %v1491 = vld [vmem:[#allocation12 + $0x280] sm:$0xff]
        %v1492 = vld [vmem:[#allocation12 + $0x288] sm:$0xff]
        %v1493 = vld [vmem:[#allocation12 + $0x290] sm:$0xff]
        %v1494 = vld [vmem:[#allocation12 + $0x298] sm:$0xff]
        %v1495 = vld [vmem:[#allocation12 + $0x2a0] sm:$0xff]
        %v1496 = vld [vmem:[#allocation12 + $0x2a8] sm:$0xff]
        %v1497 = vld [vmem:[#allocation12 + $0x2b0] sm:$0xff]
        %v1498 = vld [vmem:[#allocation12 + $0x2b8] sm:$0xff]
        %v1499 = vld [vmem:[#allocation12 + $0x2c0] sm:$0xff]
        %v1500 = vld [vmem:[#allocation12 + $0x2c8] sm:$0xff]
        %v1501 = vld [vmem:[#allocation12 + $0x2d0] sm:$0xff]
        %v1502 = vld [vmem:[#allocation12 + $0x2d8] sm:$0xff]
        %v1503 = vld [vmem:[#allocation12 + $0x2e0] sm:$0xff]
        %v1504 = vld [vmem:[#allocation12 + $0x2e8] sm:$0xff]
        %v1505 = vld [vmem:[#allocation12 + $0x2f0] sm:$0xff]
        %v1506 = vld [vmem:[#allocation12 + $0x2f8] sm:$0xff]
        %v1507 = vld [vmem:[#allocation12 + $0x300] sm:$0xff]
        %v1508 = vld [vmem:[#allocation12 + $0x308] sm:$0xff]
        %v1509 = vld [vmem:[#allocation12 + $0x310] sm:$0xff]
        %v1510 = vld [vmem:[#allocation12 + $0x318] sm:$0xff]
        %v1511 = vld [vmem:[#allocation12 + $0x320] sm:$0xff]
        %v1512 = vld [vmem:[#allocation12 + $0x328] sm:$0xff]
        %v1513 = vld [vmem:[#allocation12 + $0x330] sm:$0xff]
        %v1514 = vld [vmem:[#allocation12 + $0x338] sm:$0xff]
        %v1515 = vld [vmem:[#allocation12 + $0x340] sm:$0xff]
        %v1516 = vld [vmem:[#allocation12 + $0x348] sm:$0xff]
        %v1517 = vld [vmem:[#allocation12 + $0x350] sm:$0xff]
        %v1518 = vld [vmem:[#allocation12 + $0x358] sm:$0xff]
        %v1519 = vld [vmem:[#allocation12 + $0x360] sm:$0xff]
        %v1520 = vld [vmem:[#allocation12 + $0x368] sm:$0xff]
        %v1521 = vld [vmem:[#allocation12 + $0x370] sm:$0xff]
        %v1522 = vld [vmem:[#allocation12 + $0x378] sm:$0xff]
        %v1523 = vld [vmem:[#allocation12 + $0x380] sm:$0xff]
        %v1524 = vld [vmem:[#allocation12 + $0x388] sm:$0xff]
        %v1525 = vld [vmem:[#allocation12 + $0x390] sm:$0xff]
        %v1526 = vld [vmem:[#allocation12 + $0x398] sm:$0xff]
        %v1527 = vld [vmem:[#allocation12 + $0x3a0] sm:$0xff]
        %v1528 = vld [vmem:[#allocation12 + $0x3a8] sm:$0xff]
        %v1529 = vld [vmem:[#allocation12 + $0x3b0] sm:$0xff]
        %v1530 = vld [vmem:[#allocation12 + $0x3b8] sm:$0xff]
        %v1531 = vld [vmem:[#allocation12 + $0x3c0] sm:$0xff]
        %v1532 = vld [vmem:[#allocation12 + $0x3c8] sm:$0xff]
        %v1533 = vld [vmem:[#allocation12 + $0x3d0] sm:$0xff]
        %v1534 = vld [vmem:[#allocation12 + $0x3d8] sm:$0xff]
        %v1535 = vld [vmem:[#allocation12 + $0x3e0] sm:$0xff]
        %v1536 = vld [vmem:[#allocation12 + $0x3e8] sm:$0xff]
        %v1537 = vld [vmem:[#allocation12 + $0x3f0] sm:$0xff]
        %v1538 = vld [vmem:[#allocation12 + $0x3f8] sm:$0xff]
        %v1539 = vld [vmem:[#allocation14] sm:$0x1]
        %v1541 = vlaneseq
        %v1542 = vshrl.u32 %v1541, 7
        %v1543 = vsub.s32 0, %v1542
        %v1544 = vrot.slane %v1539, %v1543
        %1546 = vmatprep.subr.mxu0 0.0
        %1547 = vmatpush1.msra.mxu0 %v1411
        %1548 = vmatprep.subr.mxu0 0.0
        %1549 = vmatpush1.msra.mxu0 %v1412
        %1550 = vmatprep.subr.mxu0 0.0
        %1551 = vmatpush1.msra.mxu0 %v1413
        %1552 = vmatprep.subr.mxu0 0.0
        %1553 = vmatpush1.msra.mxu0 %v1414
        %1554 = vmatprep.subr.mxu0 0.0
        %1555 = vmatpush1.msra.mxu0 %v1415
        %1556 = vmatprep.subr.mxu0 0.0
        %1557 = vmatpush1.msra.mxu0 %v1416
        %1558 = vmatprep.subr.mxu0 0.0
        %1559 = vmatpush1.msra.mxu0 %v1417
        %1560 = vmatprep.subr.mxu0 0.0
        %1561 = vmatpush1.msra.mxu0 %v1418
        %1562 = vmatprep.subr.mxu0 0.0
        %1563 = vmatpush1.msra.mxu0 %v1419
        %1564 = vmatprep.subr.mxu0 0.0
        %1565 = vmatpush1.msra.mxu0 %v1420
        %1566 = vmatprep.subr.mxu0 0.0
        %1567 = vmatpush1.msra.mxu0 %v1421
        %1568 = vmatprep.subr.mxu0 0.0
        %1569 = vmatpush1.msra.mxu0 %v1422
        %1570 = vmatprep.subr.mxu0 0.0
        %1571 = vmatpush1.msra.mxu0 %v1423
        %1572 = vmatprep.subr.mxu0 0.0
        %1573 = vmatpush1.msra.mxu0 %v1424
        %1574 = vmatprep.subr.mxu0 0.0
        %1575 = vmatpush1.msra.mxu0 %v1425
        %1576 = vmatprep.subr.mxu0 0.0
        %1577 = vmatpush1.msra.mxu0 %v1426
        %1578 = vmatprep.subr.mxu0 0.0
        %1579 = vmatpush1.msra.mxu0 %v1427
        %1580 = vmatprep.subr.mxu0 0.0
        %1581 = vmatpush1.msra.mxu0 %v1428
        %1582 = vmatprep.subr.mxu0 0.0
        %1583 = vmatpush1.msra.mxu0 %v1429
        %1584 = vmatprep.subr.mxu0 0.0
        %1585 = vmatpush1.msra.mxu0 %v1430
        %1586 = vmatprep.subr.mxu0 0.0
        %1587 = vmatpush1.msra.mxu0 %v1431
        %1588 = vmatprep.subr.mxu0 0.0
        %1589 = vmatpush1.msra.mxu0 %v1432
        %1590 = vmatprep.subr.mxu0 0.0
        %1591 = vmatpush1.msra.mxu0 %v1433
        %1592 = vmatprep.subr.mxu0 0.0
        %1593 = vmatpush1.msra.mxu0 %v1434
        %1594 = vmatprep.subr.mxu0 0.0
        %1595 = vmatpush1.msra.mxu0 %v1435
        %1596 = vmatprep.subr.mxu0 0.0
        %1597 = vmatpush1.msra.mxu0 %v1436
        %1598 = vmatprep.subr.mxu0 0.0
        %1599 = vmatpush1.msra.mxu0 %v1437
        %1600 = vmatprep.subr.mxu0 0.0
        %1601 = vmatpush1.msra.mxu0 %v1438
        %1602 = vmatprep.subr.mxu0 0.0
        %1603 = vmatpush1.msra.mxu0 %v1439
        %1604 = vmatprep.subr.mxu0 0.0
        %1605 = vmatpush1.msra.mxu0 %v1440
        %1606 = vmatprep.subr.mxu0 0.0
        %1607 = vmatpush1.msra.mxu0 %v1441
        %1608 = vmatprep.subr.mxu0 0.0
        %1609 = vmatpush1.msra.mxu0 %v1442
        %1610 = vmatprep.mubr.f32.mxu0 %v1388
        %1611 = vmatmul.mubr.f32.gmra.mrb[0].mxu0 %v1387
        %v1612 = vpop.f32.mrb[0].mxu0
        %v1613 = vadd.f32 %v1544, %v1612
        %v1614 = vpop.f32.mrb[0].mxu0
        %1615 = vdwg.mxu0
        %1616 = vmatprep.subr.mxu0 0.0
        %1617 = vmatpush1.msra.mxu0 %v1443
        %1618 = vmatprep.subr.mxu0 0.0
        %1619 = vmatpush1.msra.mxu0 %v1444
        %1620 = vmatprep.subr.mxu0 0.0
        %1621 = vmatpush1.msra.mxu0 %v1445
        %1622 = vmatprep.subr.mxu0 0.0
        %1623 = vmatpush1.msra.mxu0 %v1446
        %1624 = vmatprep.subr.mxu0 0.0
        %1625 = vmatpush1.msra.mxu0 %v1447
        %1626 = vmatprep.subr.mxu0 0.0
        %1627 = vmatpush1.msra.mxu0 %v1448
        %1628 = vmatprep.subr.mxu0 0.0
        %1629 = vmatpush1.msra.mxu0 %v1449
        %1630 = vmatprep.subr.mxu0 0.0
        %1631 = vmatpush1.msra.mxu0 %v1450
        %1632 = vmatprep.subr.mxu0 0.0
        %1633 = vmatpush1.msra.mxu0 %v1451
        %1634 = vmatprep.subr.mxu0 0.0
        %1635 = vmatpush1.msra.mxu0 %v1452
        %1636 = vmatprep.subr.mxu0 0.0
        %1637 = vmatpush1.msra.mxu0 %v1453
        %1638 = vmatprep.subr.mxu0 0.0
        %1639 = vmatpush1.msra.mxu0 %v1454
        %1640 = vmatprep.subr.mxu0 0.0
        %1641 = vmatpush1.msra.mxu0 %v1455
        %1642 = vmatprep.subr.mxu0 0.0
        %1643 = vmatpush1.msra.mxu0 %v1456
        %1644 = vmatprep.subr.mxu0 0.0
        %1645 = vmatpush1.msra.mxu0 %v1457
        %1646 = vmatprep.subr.mxu0 0.0
        %1647 = vmatpush1.msra.mxu0 %v1458
        %1648 = vmatprep.subr.mxu0 0.0
        %1649 = vmatpush1.msra.mxu0 %v1459
        %1650 = vmatprep.subr.mxu0 0.0
        %1651 = vmatpush1.msra.mxu0 %v1460
        %1652 = vmatprep.subr.mxu0 0.0
        %1653 = vmatpush1.msra.mxu0 %v1461
        %1654 = vmatprep.subr.mxu0 0.0
        %1655 = vmatpush1.msra.mxu0 %v1462
        %1656 = vmatprep.subr.mxu0 0.0
        %1657 = vmatpush1.msra.mxu0 %v1463
        %1658 = vmatprep.subr.mxu0 0.0
        %1659 = vmatpush1.msra.mxu0 %v1464
        %1660 = vmatprep.subr.mxu0 0.0
        %1661 = vmatpush1.msra.mxu0 %v1465
        %1662 = vmatprep.subr.mxu0 0.0
        %1663 = vmatpush1.msra.mxu0 %v1466
        %1664 = vmatprep.subr.mxu0 0.0
        %1665 = vmatpush1.msra.mxu0 %v1467
        %1666 = vmatprep.subr.mxu0 0.0
        %1667 = vmatpush1.msra.mxu0 %v1468
        %1668 = vmatprep.subr.mxu0 0.0
        %1669 = vmatpush1.msra.mxu0 %v1469
        %1670 = vmatprep.subr.mxu0 0.0
        %1671 = vmatpush1.msra.mxu0 %v1470
        %1672 = vmatprep.subr.mxu0 0.0
        %1673 = vmatpush1.msra.mxu0 %v1471
        %1674 = vmatprep.subr.mxu0 0.0
        %1675 = vmatpush1.msra.mxu0 %v1472
        %1676 = vmatprep.subr.mxu0 0.0
        %1677 = vmatpush1.msra.mxu0 %v1473
        %1678 = vmatprep.subr.mxu0 0.0
        %1679 = vmatpush1.msra.mxu0 %v1474
        %1680 = vmatprep.mubr.f32.mxu0 %v1390
        %1681 = vmatmul.mubr.f32.gmra.mrb[0].mxu0 %v1389
        %v1682 = vpop.f32.mrb[0].mxu0
        %v1683 = vadd.f32 %v1613, %v1682
        %v1684 = vpop.f32.mrb[0].mxu0
        %1685 = vdwg.mxu0
        %1686 = vmatprep.subr.mxu0 0.0
        %1687 = vmatpush1.msra.mxu0 %v1475
        %1688 = vmatprep.subr.mxu0 0.0
        %1689 = vmatpush1.msra.mxu0 %v1476
        %1690 = vmatprep.subr.mxu0 0.0
        %1691 = vmatpush1.msra.mxu0 %v1477
        %1692 = vmatprep.subr.mxu0 0.0
        %1693 = vmatpush1.msra.mxu0 %v1478
        %1694 = vmatprep.subr.mxu0 0.0
        %1695 = vmatpush1.msra.mxu0 %v1479
        %1696 = vmatprep.subr.mxu0 0.0
        %1697 = vmatpush1.msra.mxu0 %v1480
        %1698 = vmatprep.subr.mxu0 0.0
        %1699 = vmatpush1.msra.mxu0 %v1481
        %1700 = vmatprep.subr.mxu0 0.0
        %1701 = vmatpush1.msra.mxu0 %v1482
        %1702 = vmatprep.subr.mxu0 0.0
        %1703 = vmatpush1.msra.mxu0 %v1483
        %1704 = vmatprep.subr.mxu0 0.0
        %1705 = vmatpush1.msra.mxu0 %v1484
        %1706 = vmatprep.subr.mxu0 0.0
        %1707 = vmatpush1.msra.mxu0 %v1485
        %1708 = vmatprep.subr.mxu0 0.0
        %1709 = vmatpush1.msra.mxu0 %v1486
        %1710 = vmatprep.subr.mxu0 0.0
        %1711 = vmatpush1.msra.mxu0 %v1487
        %1712 = vmatprep.subr.mxu0 0.0
        %1713 = vmatpush1.msra.mxu0 %v1488
        %1714 = vmatprep.subr.mxu0 0.0
        %1715 = vmatpush1.msra.mxu0 %v1489
        %1716 = vmatprep.subr.mxu0 0.0
        %1717 = vmatpush1.msra.mxu0 %v1490
        %1718 = vmatprep.subr.mxu0 0.0
        %1719 = vmatpush1.msra.mxu0 %v1491
        %1720 = vmatprep.subr.mxu0 0.0
        %1721 = vmatpush1.msra.mxu0 %v1492
        %1722 = vmatprep.subr.mxu0 0.0
        %1723 = vmatpush1.msra.mxu0 %v1493
        %1724 = vmatprep.subr.mxu0 0.0
        %1725 = vmatpush1.msra.mxu0 %v1494
        %1726 = vmatprep.subr.mxu0 0.0
        %1727 = vmatpush1.msra.mxu0 %v1495
        %1728 = vmatprep.subr.mxu0 0.0
        %1729 = vmatpush1.msra.mxu0 %v1496
        %1730 = vmatprep.subr.mxu0 0.0
        %1731 = vmatpush1.msra.mxu0 %v1497
        %1732 = vmatprep.subr.mxu0 0.0
        %1733 = vmatpush1.msra.mxu0 %v1498
        %1734 = vmatprep.subr.mxu0 0.0
        %1735 = vmatpush1.msra.mxu0 %v1499
        %1736 = vmatprep.subr.mxu0 0.0
        %1737 = vmatpush1.msra.mxu0 %v1500
        %1738 = vmatprep.subr.mxu0 0.0
        %1739 = vmatpush1.msra.mxu0 %v1501
        %1740 = vmatprep.subr.mxu0 0.0
        %1741 = vmatpush1.msra.mxu0 %v1502
        %1742 = vmatprep.subr.mxu0 0.0
        %1743 = vmatpush1.msra.mxu0 %v1503
        %1744 = vmatprep.subr.mxu0 0.0
        %1745 = vmatpush1.msra.mxu0 %v1504
        %1746 = vmatprep.subr.mxu0 0.0
        %1747 = vmatpush1.msra.mxu0 %v1505
        %1748 = vmatprep.subr.mxu0 0.0
        %1749 = vmatpush1.msra.mxu0 %v1506
        %1750 = vmatprep.mubr.f32.mxu0 %v1392
        %1751 = vmatmul.mubr.f32.gmra.mrb[0].mxu0 %v1391
        %v1752 = vpop.f32.mrb[0].mxu0
        %v1753 = vadd.f32 %v1683, %v1752
        %v1754 = vpop.f32.mrb[0].mxu0
        %1755 = vdwg.mxu0
        %1756 = vmatprep.subr.mxu0 0.0
        %1757 = vmatpush1.msra.mxu0 %v1507
        %1758 = vmatprep.subr.mxu0 0.0
        %1759 = vmatpush1.msra.mxu0 %v1508
        %1760 = vmatprep.subr.mxu0 0.0
        %1761 = vmatpush1.msra.mxu0 %v1509
        %1762 = vmatprep.subr.mxu0 0.0
        %1763 = vmatpush1.msra.mxu0 %v1510
        %1764 = vmatprep.subr.mxu0 0.0
        %1765 = vmatpush1.msra.mxu0 %v1511
        %1766 = vmatprep.subr.mxu0 0.0
        %1767 = vmatpush1.msra.mxu0 %v1512
        %1768 = vmatprep.subr.mxu0 0.0
        %1769 = vmatpush1.msra.mxu0 %v1513
        %1770 = vmatprep.subr.mxu0 0.0
        %1771 = vmatpush1.msra.mxu0 %v1514
        %1772 = vmatprep.subr.mxu0 0.0
        %1773 = vmatpush1.msra.mxu0 %v1515
        %1774 = vmatprep.subr.mxu0 0.0
        %1775 = vmatpush1.msra.mxu0 %v1516
        %1776 = vmatprep.subr.mxu0 0.0
        %1777 = vmatpush1.msra.mxu0 %v1517
        %1778 = vmatprep.subr.mxu0 0.0
        %1779 = vmatpush1.msra.mxu0 %v1518
        %1780 = vmatprep.subr.mxu0 0.0
        %1781 = vmatpush1.msra.mxu0 %v1519
        %1782 = vmatprep.subr.mxu0 0.0
        %1783 = vmatpush1.msra.mxu0 %v1520
        %1784 = vmatprep.subr.mxu0 0.0
        %1785 = vmatpush1.msra.mxu0 %v1521
        %1786 = vmatprep.subr.mxu0 0.0
        %1787 = vmatpush1.msra.mxu0 %v1522
        %1788 = vmatprep.subr.mxu0 0.0
        %1789 = vmatpush1.msra.mxu0 %v1523
        %1790 = vmatprep.subr.mxu0 0.0
        %1791 = vmatpush1.msra.mxu0 %v1524
        %1792 = vmatprep.subr.mxu0 0.0
        %1793 = vmatpush1.msra.mxu0 %v1525
        %1794 = vmatprep.subr.mxu0 0.0
        %1795 = vmatpush1.msra.mxu0 %v1526
        %1796 = vmatprep.subr.mxu0 0.0
        %1797 = vmatpush1.msra.mxu0 %v1527
        %1798 = vmatprep.subr.mxu0 0.0
        %1799 = vmatpush1.msra.mxu0 %v1528
        %1800 = vmatprep.subr.mxu0 0.0
        %1801 = vmatpush1.msra.mxu0 %v1529
        %1802 = vmatprep.subr.mxu0 0.0
        %1803 = vmatpush1.msra.mxu0 %v1530
        %1804 = vmatprep.subr.mxu0 0.0
        %1805 = vmatpush1.msra.mxu0 %v1531
        %1806 = vmatprep.subr.mxu0 0.0
        %1807 = vmatpush1.msra.mxu0 %v1532
        %1808 = vmatprep.subr.mxu0 0.0
        %1809 = vmatpush1.msra.mxu0 %v1533
        %1810 = vmatprep.subr.mxu0 0.0
        %1811 = vmatpush1.msra.mxu0 %v1534
        %1812 = vmatprep.subr.mxu0 0.0
        %1813 = vmatpush1.msra.mxu0 %v1535
        %1814 = vmatprep.subr.mxu0 0.0
        %1815 = vmatpush1.msra.mxu0 %v1536
        %1816 = vmatprep.subr.mxu0 0.0
        %1817 = vmatpush1.msra.mxu0 %v1537
        %1818 = vmatprep.subr.mxu0 0.0
        %1819 = vmatpush1.msra.mxu0 %v1538
        %1820 = vmatprep.mubr.f32.mxu0 %v1394
        %1821 = vmatmul.mubr.f32.gmra.mrb[0].mxu0 %v1393
        %v1822 = vpop.f32.mrb[0].mxu0
        %v1823 = vadd.f32 %v1753, %v1822
        %v1824 = vpop.f32.mrb[0].mxu0
        %1825 = vdwg.mxu0
        %1826 = vst [vmem:[%s480] sm:$0xff] %v1823
        %s1827 = sand.u32 %s209, 1
        %s1828 = scalar_lea.sflag [#allocation5], %s1827
        %s1829 = sand.u32 %s209, 1
        %s1830 = smul.addr %s1829, 64
        %s1831 = scalar_lea.vmem [#allocation15], %s1830
        %s1832 = sand.u32 %s235, 1
        %s1833 = scalar_lea.sflag [#allocation17], %s1832
        %s1834 = sand.u32 %s235, 1
        %s1835 = smul.addr %s1834, 8
        %s1836 = scalar_lea.vmem [#allocation16], %s1835
        // Predicated region
        $region81: #{_fused_resnet.1} parent=47 // pred_check
          %p1837 = pneg %p219
        $region82: #{_fused_resnet.1} parent=47 // pred_check_branch
          %1839 = sbr.rel (%p1837) target = $region84
        $region83: #{_fused_resnet.1} parent=47 // pred_region
          %s1841 = ssub.s32 1024, 1024
          %1842 = vsyncadd %s1828, %s1841
          %s1843 = smul.addr %s34, 8
          %s1844 = smul.addr %s1843, 128
          %s1845 = scalar_lea.hbm %s7, %s1844
          %s1847 = sshll.u32 %s1831, 4
          %s1848 = int_to_ptr.vmem [resolvable:$true] %s1847
          %1850 = dma.vmem_to_hbm [thread:$0]  %s1848, 1024, %s1845, %s1828
        $region84: #{_fused_resnet.1} parent=47 // pred_fallthru
          _
        // Predicated region
        $region85: #{_fused_resnet.1} parent=47 // pred_check
          %p1851 = pneg %p245
        $region86: #{_fused_resnet.1} parent=47 // pred_check_branch
          %1853 = sbr.rel (%p1851) target = $region88
        $region87: #{_fused_resnet.1} parent=47 // pred_region
          %s1855 = ssub.s32 128, 128
          %1856 = vsyncadd %s1833, %s1855
          %s1857 = smul.addr %s34, 128
          %s1858 = scalar_lea.hbm %s8, %s1857
          %s1860 = sshll.u32 %s1836, 4
          %s1861 = int_to_ptr.vmem [resolvable:$true] %s1860
          %1863 = dma.vmem_to_hbm [thread:$0]  %s1861, 128, %s1858, %s1833
        $region88: #{_fused_resnet.1} parent=47 // pred_fallthru
          _
      $region48: #{_fused_resnet.1} parent=5 // pred_fallthru
        _
      %p1864 = scmp.le.s32.totalorder 2, %s29
      // Predicated region
      $region89: #{_fused_resnet.1} parent=5 // pred_check
        %p1865 = pneg %p1864
      $region90: #{_fused_resnet.1} parent=5 // pred_check_branch
        %1867 = sbr.rel (%p1865) target = $region92
      $region91: #{_fused_resnet.1} parent=5 // pred_region
        %s1868 = ssub.s32 %s29, 2
        // Predicated region
        $region93: #{_fused_resnet.1} parent=91 // pred_check
          %p1869 = pneg %p225
        $region94: #{_fused_resnet.1} parent=91 // pred_check_branch
          %1871 = sbr.rel (%p1869) target = $region96
        $region95: #{_fused_resnet.1} parent=91 // pred_region
          %s1872 = sand.u32 %s210, 1
          %s1873 = scalar_lea.sflag [#allocation5], %s1872
          %s1874 = sand.u32 %s210, 1
          %s1875 = smul.addr %s1874, 64
          %s1876 = scalar_lea.vmem [#allocation15], %s1875
          %1877 = dma.done %s1873, 1024
        $region96: #{_fused_resnet.1} parent=91 // pred_fallthru
          _
        // Predicated region
        $region97: #{_fused_resnet.1} parent=91 // pred_check
          %p1878 = pneg %p251
        $region98: #{_fused_resnet.1} parent=91 // pred_check_branch
          %1880 = sbr.rel (%p1878) target = $region100
        $region99: #{_fused_resnet.1} parent=91 // pred_region
          %s1881 = sand.u32 %s236, 1
          %s1882 = scalar_lea.sflag [#allocation17], %s1881
          %s1883 = sand.u32 %s236, 1
          %s1884 = smul.addr %s1883, 8
          %s1885 = scalar_lea.vmem [#allocation16], %s1884
          %1886 = dma.done %s1882, 128
        $region100: #{_fused_resnet.1} parent=91 // pred_fallthru
          _
      $region92: #{_fused_resnet.1} parent=5 // pred_fallthru
        _
    $region6: #{_fused_resnet.1} parent=1 // loop_footer
      %s33 = sadd.s32 1, %s29
    $region7: #{_fused_resnet.1} parent=1 // loop_footer_branch
      %28 = sbr.rel target = $region3
    $region8: #{_fused_resnet.1} parent=1 // loop_exit
      _
    %1887 = vsyncpa [#allocation4], 1
    %s1888 = scalar_lea.sflag [#allocation4], 1
    %1889 = vsyncpa %s1888, 1
    %1890 = vsyncpa [#allocation7], 1
    %s1891 = scalar_lea.sflag [#allocation7], 1
    %1892 = vsyncpa %s1891, 1
    %1893 = vsyncpa [#allocation10], 1
    %s1894 = scalar_lea.sflag [#allocation10], 1
    %1895 = vsyncpa %s1894, 1
    %1896 = vsyncpa [#allocation13], 1
    %1897 = vsyncpa [#allocation5], 1
    %s1898 = scalar_lea.sflag [#allocation5], 1
    %1899 = vsyncpa %s1898, 1
    %1900 = vsyncpa [#allocation17], 1
    %s1901 = scalar_lea.sflag [#allocation17], 1
    %1902 = vsyncpa %s1901, 1

</llo_original>
